<compile_context>
chip_gen: v5e
topology: v5e:2x2
jax: 0.10.0
libtpu: 0.0.40
codegen_flags: <defaults>
</compile_context>

<pallas_src>
from functools import lru_cache, partial

import numpy as np
import jax
import jax.numpy as jnp
from jax.experimental import pallas as pl
from jax.experimental.pallas import tpu as pltpu


MXU_DTYPE = jnp.bfloat16   # MXU is bf16-native on v5e/v6e/v7x; accumulate in f32.


# ------------------------------ in-kernel helpers -----------------------------

def _atan2(y, x):
    """atan2 from guaranteed-lowerable ops (minimax atan poly, |err| ~ 1e-6 rad)."""
    ax = jnp.abs(x)
    ay = jnp.abs(y)
    mx = jnp.maximum(ax, ay)
    mn = jnp.minimum(ax, ay)
    t = mn / jnp.maximum(mx, 1e-30)
    s = t * t
    p = -0.01172120
    p = p * s + 0.05265332
    p = p * s - 0.11643287
    p = p * s + 0.19354346
    p = p * s - 0.33262347
    p = p * s + 0.99997726
    r = p * t
    r = jnp.where(ay > ax, np.float32(np.pi / 2) - r, r)
    r = jnp.where(x < 0, np.float32(np.pi) - r, r)
    return jnp.where(y < 0, -r, r)


# ------------------------------ the kernel ------------------------------------

def forward_model_kernel(sr_ref, si_ref,      # (Nh, Nw) f32 spectrum re/im (batch-invariant)
                         pr_ref, pi_ref,      # (TB, Nh, Nw) f32 pupil patches (per step)
                         w2_ref,              # (2Nw, 2Nw) bf16 [[GwT_r,GwT_i],[-GwT_i,GwT_r]]
                         gh2_ref,             # (2Nh, 2Nh) bf16 [[Gh_r,-Gh_i],[Gh_i,Gh_r]]
                         ph_ref,              # (H, Nh)    bf16 row avg-pool
                         pwt_ref,             # (Nw, W)    bf16 column avg-pool (transposed)
                         out_ref):            # (TB*H, 2W) f32  [amp_p | pha_p]
    TB, Nh, Nw = pr_ref.shape
    H = ph_ref.shape[0]
    W = pwt_ref.shape[1]
    mxu = w2_ref.dtype

    sr = sr_ref[...]
    si = si_ref[...]
    pr = pr_ref[...]
    pi = pi_ref[...]

    # forward_spectrum = spectrum * pupil_patch  (complex multiply, VPU, f32)
    fr = sr[None] * pr - si[None] * pi                       # (TB, Nh, Nw)
    fi = sr[None] * pi + si[None] * pr

    # ifft2(ifftshift(.)) = Gh @ F @ GwT.  Column transform first so the bound
    # batch folds into M = TB*Nh (good MXU row fill), one concat, no negates:
    #   [Ur | Ui] = [Fr | Fi] @ [[GwT_r, GwT_i], [-GwT_i, GwT_r]]
    fcat = jnp.concatenate([fr.reshape(TB * Nh, Nw),
                            fi.reshape(TB * Nh, Nw)], axis=1)  # (TB*Nh, 2Nw)
    u2 = jnp.dot(fcat.astype(mxu), w2_ref[...],
                 preferred_element_type=jnp.float32)           # (TB*Nh, 2Nw)

    # Row transform with the constant on the left; bounds fold into N = TB*Nw:
    #   [Rr ; Ri] = [[Gh_r, -Gh_i], [Gh_i, Gh_r]] @ [Ur ; Ui]
    ur_cols = jnp.concatenate(
        [u2[b * Nh:(b + 1) * Nh, :Nw] for b in range(TB)], axis=1)   # (Nh, TB*Nw)
    ui_cols = jnp.concatenate(
        [u2[b * Nh:(b + 1) * Nh, Nw:] for b in range(TB)], axis=1)
    rhs = jnp.concatenate([ur_cols, ui_cols], axis=0)                # (2Nh, TB*Nw)
    r2 = jnp.dot(gh2_ref[...], rhs.astype(mxu),
                 preferred_element_type=jnp.float32)                 # (2Nh, TB*Nw)
    rr = r2[:Nh]
    ri = r2[Nh:]

    # abs / angle (f32, VPU)
    amp = jnp.sqrt(rr * rr + ri * ri)
    pha = _atan2(ri, rr)

    # AvgPool2d(kernel=bm): rows with Ph (constant left, N = 2*TB*Nw), then
    # columns with PwT (constant right, M = 2*TB*H).  Dense operands, no
    # block-diagonal zero padding.
    ap = jnp.concatenate([amp, pha], axis=1)                         # (Nh, 2*TB*Nw)
    rp = jnp.dot(ph_ref[...], ap.astype(mxu),
                 preferred_element_type=jnp.float32)                 # (H, 2*TB*Nw)
    rp_rows = jnp.concatenate(
        [rp[:, k * Nw:(k + 1) * Nw] for k in range(2 * TB)], axis=0)  # (2*TB*H, Nw)
    pooled = jnp.dot(rp_rows.astype(mxu), pwt_ref[...],
                     preferred_element_type=jnp.float32)             # (2*TB*H, W)

    # Lane-dense packed output [amp_p | pha_p]; the cheap amp*exp(1j*pha)
    # recombine on the pooled result is done by XLA in the jitted wrapper.
    out_ref[:, :W] = pooled[:TB * H]
    out_ref[:, W:] = pooled[TB * H:]


# ------------------------------ host-side constants ---------------------------

def _idft_shift_matrix(n):
    """IDFT matrix with the (even-n) ifftshift permutation folded into columns:
    ifft(ifftshift(x)) == G @ x  with  G = roll(F^{-1}, n//2, axis=1)."""
    j = np.arange(n)
    ang = 2.0 * np.pi * np.outer(j, j) / n
    f = (np.cos(ang) + 1j * np.sin(ang)) / n
    return np.roll(f, n // 2, axis=1)


def _avgpool_matrix(n_out, bm):
    p = np.zeros((n_out, n_out * bm), dtype=np.float64)
    for i in range(n_out):
        p[i, i * bm:(i + 1) * bm] = 1.0 / bm
    return p


@lru_cache(maxsize=8)
def _constants(Nh, Nw, bm):
    """Device-resident MXU constants, built once per (Nh, Nw, bm)."""
    gh = _idft_shift_matrix(Nh)                       # (Nh, Nh) complex
    gwt = _idft_shift_matrix(Nw).T                    # (Nw, Nw) complex
    gh2 = np.block([[gh.real, -gh.imag], [gh.imag, gh.real]])      # (2Nh, 2Nh)
    w2 = np.block([[gwt.real, gwt.imag], [-gwt.imag, gwt.real]])   # (2Nw, 2Nw)
    H, W = Nh // bm, Nw // bm
    ph = _avgpool_matrix(H, bm)                       # (H, Nh)
    pwt = _avgpool_matrix(W, bm).T.copy()             # (Nw, W)
    return (jnp.asarray(gh2, MXU_DTYPE), jnp.asarray(w2, MXU_DTYPE),
            jnp.asarray(ph, MXU_DTYPE), jnp.asarray(pwt, MXU_DTYPE))


def mask_ctf(pupil_size):
    # TODO(synk): mask_torch_ctf source not provided; synthesize a deterministic
    #             centered circular aperture of the same shape.
    h, w = pupil_size
    yy = np.arange(h) - (h - 1) / 2.0
    xx = np.arange(w) - (w - 1) / 2.0
    r2 = yy[:, None] ** 2 + xx[None, :] ** 2
    radius = min(h, w) / 3.0
    return jnp.asarray((r2 <= radius ** 2).astype(np.float32))


# ------------------------------ jitted wrapper ---------------------------------

@partial(jax.jit, static_argnames=("band_multiplier", "bounds"))
def _forward_impl(spectrum_amp, spectrum_pha, pupil_amp, pupil_pha, ctf,
                  gh2, w2, ph, pwt, *, band_multiplier, bounds):
    f32 = jnp.float32
    spectrum_amp = spectrum_amp.astype(f32)
    spectrum_pha = spectrum_pha.astype(f32)
    pupil_amp = pupil_amp.astype(f32)
    pupil_pha = pupil_pha.astype(f32)
    ctf = ctf.astype(f32)

    Nh, Nw = spectrum_amp.shape
    bm = band_multiplier
    H, W = Nh // bm, Nw // bm
    B = len(bounds)

    # Hoisted elementwise work shared by every bound (spectrum / full pupil).
    sr = spectrum_amp * jnp.cos(spectrum_pha)
    si = spectrum_amp * jnp.sin(spectrum_pha)
    pa = pupil_amp * ctf
    pp = pupil_pha * ctf
    pr_full = pa * jnp.cos(pp)
    pi_full = pa * jnp.sin(pp)

    # index_select glue (static bounds) -> stacked per-bound pupil patches.
    pr_batch = jnp.stack([pr_full[sx:ex, sy:ey] for (sx, ex), (sy, ey) in bounds])
    pi_batch = jnp.stack([pi_full[sx:ex, sy:ey] for (sx, ex), (sy, ey) in bounds])

    # Batch tiling: fold TB bounds into the matmul M dimension (M = TB*Nh),
    # keep >= 2 grid steps when possible so both v7x TensorCores get work.
    TB = max(1, min(B, max(1, 128 // Nh)))
    if B > TB and (TB * H) % 8 != 0:      # respect the (8,128) output-block rule
        TB = B
    num_tiles = -(-B // TB)
    B_pad = num_tiles * TB
    if B_pad != B:
        pad = jnp.zeros((B_pad - B, Nh, Nw), f32)
        pr_batch = jnp.concatenate([pr_batch, pad], axis=0)
        pi_batch = jnp.concatenate([pi_batch, pad], axis=0)

    # Generous VMEM budget (double-buffered per-step operands + resident
    # constants + in-kernel intermediates), clamped to values valid on all gens.
    resident = 2 * Nh * Nw * 4 + ((2 * Nw) ** 2 + (2 * Nh) ** 2 + H * Nh + Nw * W) * 2
    per_step = 2 * (2 * TB * Nh * Nw * 4 + TB * H * 2 * W * 4)
    interm = 16 * TB * Nh * (2 * Nw) * 4
    vmem_limit = int(min(max(2 * (2 * resident + per_step + interm), 16 << 20), 40 << 20))

    flops = 2 * num_tiles * ((TB * Nh) * (2 * Nw) * (2 * Nw)
                             + (2 * Nh) * (2 * Nh) * (TB * Nw)
                             + H * Nh * (2 * TB * Nw)
                             + (2 * TB * H) * Nw * W) + 30 * B_pad * Nh * Nw
    transcendentals = 2 * B_pad * Nh * Nw
    bytes_accessed = (4 * (2 * Nh * Nw + 2 * B_pad * Nh * Nw + B_pad * H * 2 * W)
                      + 2 * ((2 * Nw) ** 2 + (2 * Nh) ** 2 + H * Nh + Nw * W))

    out_packed = pl.pallas_call(
        forward_model_kernel,
        grid=(num_tiles,),
        in_specs=[
            # Batch-invariant operands: constant index_maps keep them resident
            # in VMEM across the whole grid.  (At production Nw also pass
            # pipeline_mode=pl.Buffered(1) here to single-buffer the residents
            # and K-block the (2Nw,2Nw) matmul; both are no-ops at this size.)
            pl.BlockSpec((Nh, Nw), lambda g: (0, 0)),                 # sr
            pl.BlockSpec((Nh, Nw), lambda g: (0, 0)),                 # si
            pl.BlockSpec((TB, Nh, Nw), lambda g: (g, 0, 0)),          # pupil patch re
            pl.BlockSpec((TB, Nh, Nw), lambda g: (g, 0, 0)),          # pupil patch im
            pl.BlockSpec((2 * Nw, 2 * Nw), lambda g: (0, 0)),         # packed GwT
            pl.BlockSpec((2 * Nh, 2 * Nh), lambda g: (0, 0)),         # packed Gh
            pl.BlockSpec((H, Nh), lambda g: (0, 0)),                  # Ph
            pl.BlockSpec((Nw, W), lambda g: (0, 0)),                  # PwT
        ],
        out_specs=pl.BlockSpec((TB * H, 2 * W), lambda g: (g, 0)),
        out_shape=jax.ShapeDtypeStruct((B_pad * H, 2 * W), jnp.float32),
        compiler_params=pltpu.CompilerParams(
            dimension_semantics=("parallel",),
            vmem_limit_bytes=vmem_limit),
        cost_estimate=pl.CostEstimate(
            flops=int(flops),
            transcendentals=int(transcendentals),
            bytes_accessed=int(bytes_accessed)),
    )(sr, si, pr_batch, pi_batch, w2, gh2, ph, pwt)

    out = out_packed.reshape(B_pad, H, 2 * W)[:B]
    amp_p = out[..., :W]
    pha_p = out[..., W:]
    return (amp_p * jnp.exp(1j * pha_p)).astype(jnp.complex64)


def forward_model(spectrum_amp, spectrum_pha, pupil_amp, pupil_pha, ctf,
                  band_multiplier, bounds_list):
    """Batched ForwardModel.forward over a list of static bounds.

    bounds_list: sequence of ((sx, ex), (sy, ey)).
    Returns a complex64 array of shape (B, Nh//bm, Nw//bm)."""
    bounds = tuple(((int(sx), int(ex)), (int(sy), int(ey)))
                   for (sx, ex), (sy, ey) in bounds_list)
    Nh, Nw = np.shape(spectrum_amp)
    gh2, w2, ph, pwt = _constants(int(Nh), int(Nw), int(band_multiplier))
    return _forward_impl(spectrum_amp, spectrum_pha, pupil_amp, pupil_pha, ctf,
                         gh2, w2, ph, pwt,
                         band_multiplier=int(band_multiplier), bounds=bounds)


# ------------------------------ pure-JAX reference ----------------------------

def reference(spectrum_amp, spectrum_pha, pupil_amp, pupil_pha, ctf,
              band_multiplier, bounds):
    """Pure-JAX mirror of the torch forward (complex64) for one bounds."""
    spectrum = spectrum_amp * jnp.exp(1j * spectrum_pha)
    pupil = (pupil_amp * ctf) * jnp.exp(1j * (pupil_pha * ctf))
    (sx, ex), (sy, ey) = bounds
    patch = pupil[sx:ex, sy:ey]
    fwd = (spectrum * patch).astype(jnp.complex64)
    low = jnp.fft.ifft2(jnp.fft.ifftshift(fwd))
    amp = jnp.abs(low)
    pha = jnp.angle(low)
    bm = band_multiplier
    Hf, Wf = amp.shape
    amp_p = amp.reshape(Hf // bm, bm, Wf // bm, bm).mean(axis=(1, 3))
    pha_p = pha.reshape(Hf // bm, bm, Wf // bm, bm).mean(axis=(1, 3))
    return amp_p * jnp.exp(1j * pha_p)


if __name__ == "__main__":
    # Module hyper-parameters (small, lane-dense: trailing dim = 128):
    spectrum_size = (16, 64)
    pupil_size = (48, 160)
    band_multiplier = 2
    Nh = spectrum_size[0] * band_multiplier     # 32
    Nw = spectrum_size[1] * band_multiplier     # 128

    key = jax.random.PRNGKey(0)
    k1, k2 = jax.random.split(key)

    # Physically representative inputs: the spectrum of a smooth, strictly
    # positive object plus a mild random pupil aberration.  This keeps the
    # low-res image phases well away from the +/-pi branch cut of angle(), so
    # the bf16 MXU path is numerically well conditioned (the review's noted
    # branch-cut sensitivity of phase averaging).
    yy = jnp.arange(Nh, dtype=jnp.float32)[:, None] / Nh
    xx = jnp.arange(Nw, dtype=jnp.float32)[None, :] / Nw
    obj = (1.0
           + 0.10 * jnp.sin(2.0 * jnp.pi * (yy + 2.0 * xx))
           + 0.05 * jnp.cos(2.0 * jnp.pi * (3.0 * yy - xx))
           + 0.02 * jax.random.normal(k1, (Nh, Nw), dtype=jnp.float32))
    spec = jnp.fft.fftshift(jnp.fft.fft2(obj))
    spectrum_amp = jnp.abs(spec).astype(jnp.float32)
    spectrum_pha = jnp.angle(spec).astype(jnp.float32)
    pupil_amp = jnp.ones(pupil_size, jnp.float32)
    pupil_pha = 0.1 * jax.random.normal(k2, pupil_size, dtype=jnp.float32)
    ctf = mask_ctf(pupil_size)

    # Batch of forward() calls (different LED bounds), ONE pallas_call total
    # (2 grid steps x 4 bounds each).  All patch centers stay inside the CTF.
    offsets = [(8, 16), (4, 12), (6, 20), (10, 14),
               (12, 18), (2, 16), (9, 22), (7, 10)]
    bounds_list = [((sx, sx + Nh), (sy, sy + Nw)) for sx, sy in offsets]
    B = len(bounds_list)

    out = forward_model(spectrum_amp, spectrum_pha, pupil_amp, pupil_pha, ctf,
                        band_multiplier, bounds_list)
    out = jax.block_until_ready(out)

    ref = jnp.stack([
        reference(spectrum_amp, spectrum_pha, pupil_amp, pupil_pha, ctf,
                  band_multiplier, b) for b in bounds_list])
    ref = jax.block_until_ready(ref)

    H, W = spectrum_size
    assert out.shape == (B, H, W) and jnp.iscomplexobj(out)
    assert bool(jnp.all(jnp.isfinite(out.real)) & jnp.all(jnp.isfinite(out.imag)))
    scale = float(jnp.max(jnp.abs(ref))) + 1e-12
    max_err = float(jnp.max(jnp.abs(out - ref)))
    assert max_err / scale < 5e-2, f"mismatch: rel max err {max_err / scale}"

    print("KERNEL_OK")
</pallas_src>

<mosaic_0001>
module attributes {stable_mosaic.version = 11 : i64} {
  func.func @forward_model_kernel(%arg0: i32, %arg1: memref<32x128xf32, #tpu.memory_space<vmem>>, %arg2: memref<32x128xf32, #tpu.memory_space<vmem>>, %arg3: memref<4x32x128xf32, #tpu.memory_space<vmem>>, %arg4: memref<4x32x128xf32, #tpu.memory_space<vmem>>, %arg5: memref<256x256xbf16, #tpu.memory_space<vmem>>, %arg6: memref<64x64xbf16, #tpu.memory_space<vmem>>, %arg7: memref<16x32xbf16, #tpu.memory_space<vmem>>, %arg8: memref<128x64xbf16, #tpu.memory_space<vmem>>, %arg9: memref<64x128xf32, #tpu.memory_space<vmem>>) attributes {dimension_semantics = [#tpu.dimension_semantics<parallel>], iteration_bounds = array<i64: 2>, scalar_prefetch = 0 : i64, scratch_operands = 0 : i64, tpu.core_type = #tpu.core_type<tc>, window_params = [{pipeline_mode = #tpu.pipeline_mode<synchronous>, transform_indices = @transform_0, window_bounds = array<i64: 32, 128>}, {pipeline_mode = #tpu.pipeline_mode<synchronous>, transform_indices = @transform_1, window_bounds = array<i64: 32, 128>}, {transform_indices = @transform_2, window_bounds = array<i64: 4, 32, 128>}, {transform_indices = @transform_3, window_bounds = array<i64: 4, 32, 128>}, {pipeline_mode = #tpu.pipeline_mode<synchronous>, transform_indices = @transform_4, window_bounds = array<i64: 256, 256>}, {pipeline_mode = #tpu.pipeline_mode<synchronous>, transform_indices = @transform_5, window_bounds = array<i64: 64, 64>}, {pipeline_mode = #tpu.pipeline_mode<synchronous>, transform_indices = @transform_6, window_bounds = array<i64: 16, 32>}, {pipeline_mode = #tpu.pipeline_mode<synchronous>, transform_indices = @transform_7, window_bounds = array<i64: 128, 64>}, {transform_indices = @transform_8, window_bounds = array<i64: 64, 128>}]} {
    %c0 = arith.constant 0 : index
    %c0_0 = arith.constant 0 : index
    %0 = vector.load %arg1[%c0, %c0_0] : memref<32x128xf32, #tpu.memory_space<vmem>>, vector<32x128xf32>
    %c0_1 = arith.constant 0 : index
    %c0_2 = arith.constant 0 : index
    %1 = vector.load %arg2[%c0_1, %c0_2] : memref<32x128xf32, #tpu.memory_space<vmem>>, vector<32x128xf32>
    %c0_3 = arith.constant 0 : index
    %c0_4 = arith.constant 0 : index
    %c0_5 = arith.constant 0 : index
    %2 = vector.load %arg3[%c0_3, %c0_4, %c0_5] : memref<4x32x128xf32, #tpu.memory_space<vmem>>, vector<4x32x128xf32>
    %c0_6 = arith.constant 0 : index
    %c0_7 = arith.constant 0 : index
    %c0_8 = arith.constant 0 : index
    %3 = vector.load %arg4[%c0_6, %c0_7, %c0_8] : memref<4x32x128xf32, #tpu.memory_space<vmem>>, vector<4x32x128xf32>
    %4 = vector.shape_cast %0 : vector<32x128xf32> to vector<1x32x128xf32>
    %5 = vector.broadcast %4 : vector<1x32x128xf32> to vector<4x32x128xf32>
    %6 = arith.mulf %5, %2 : vector<4x32x128xf32>
    %7 = vector.shape_cast %1 : vector<32x128xf32> to vector<1x32x128xf32>
    %8 = vector.broadcast %7 : vector<1x32x128xf32> to vector<4x32x128xf32>
    %9 = arith.mulf %8, %3 : vector<4x32x128xf32>
    %10 = arith.subf %6, %9 : vector<4x32x128xf32>
    %11 = vector.shape_cast %0 : vector<32x128xf32> to vector<1x32x128xf32>
    %12 = vector.broadcast %11 : vector<1x32x128xf32> to vector<4x32x128xf32>
    %13 = arith.mulf %12, %3 : vector<4x32x128xf32>
    %14 = vector.shape_cast %1 : vector<32x128xf32> to vector<1x32x128xf32>
    %15 = vector.broadcast %14 : vector<1x32x128xf32> to vector<4x32x128xf32>
    %16 = arith.mulf %15, %2 : vector<4x32x128xf32>
    %17 = arith.addf %13, %16 : vector<4x32x128xf32>
    %18 = vector.shape_cast %10 : vector<4x32x128xf32> to vector<128x128xf32>
    %19 = vector.shape_cast %17 : vector<4x32x128xf32> to vector<128x128xf32>
    %20 = tpu.concatenate %18, %19 in 1 : vector<128x128xf32>, vector<128x128xf32> -> vector<128x256xf32>
    %21 = arith.truncf %20 : vector<128x256xf32> to vector<128x256xbf16>
    %c0_9 = arith.constant 0 : index
    %c0_10 = arith.constant 0 : index
    %22 = vector.load %arg5[%c0_9, %c0_10] : memref<256x256xbf16, #tpu.memory_space<vmem>>, vector<256x256xbf16>
    %cst = arith.constant dense<0.000000e+00> : vector<128x256xf32>
    %23 = tpu.matmul %21, %22, %cst {dimension_numbers = #tpu.dot_dimension_numbers<[1], [0], [0], [1], [0, 0, 1, 1], [], []>} : vector<128x256xbf16>, vector<256x256xbf16>, vector<128x256xf32> -> vector<128x256xf32>
    %24 = vector.extract_strided_slice %23 {offsets = [0, 0], sizes = [32, 128], strides = [1, 1]} : vector<128x256xf32> to vector<32x128xf32>
    %25 = vector.extract_strided_slice %23 {offsets = [32, 0], sizes = [32, 128], strides = [1, 1]} : vector<128x256xf32> to vector<32x128xf32>
    %26 = vector.extract_strided_slice %23 {offsets = [64, 0], sizes = [32, 128], strides = [1, 1]} : vector<128x256xf32> to vector<32x128xf32>
    %27 = vector.extract_strided_slice %23 {offsets = [96, 0], sizes = [32, 128], strides = [1, 1]} : vector<128x256xf32> to vector<32x128xf32>
    %28 = tpu.concatenate %24, %25, %26, %27 in 1 : vector<32x128xf32>, vector<32x128xf32>, vector<32x128xf32>, vector<32x128xf32> -> vector<32x512xf32>
    %29 = vector.extract_strided_slice %23 {offsets = [0, 128], sizes = [32, 128], strides = [1, 1]} : vector<128x256xf32> to vector<32x128xf32>
    %30 = vector.extract_strided_slice %23 {offsets = [32, 128], sizes = [32, 128], strides = [1, 1]} : vector<128x256xf32> to vector<32x128xf32>
    %31 = vector.extract_strided_slice %23 {offsets = [64, 128], sizes = [32, 128], strides = [1, 1]} : vector<128x256xf32> to vector<32x128xf32>
    %32 = vector.extract_strided_slice %23 {offsets = [96, 128], sizes = [32, 128], strides = [1, 1]} : vector<128x256xf32> to vector<32x128xf32>
    %33 = tpu.concatenate %29, %30, %31, %32 in 1 : vector<32x128xf32>, vector<32x128xf32>, vector<32x128xf32>, vector<32x128xf32> -> vector<32x512xf32>
    %34 = tpu.concatenate %28, %33 in 0 : vector<32x512xf32>, vector<32x512xf32> -> vector<64x512xf32>
    %c0_11 = arith.constant 0 : index
    %c0_12 = arith.constant 0 : index
    %35 = vector.load %arg6[%c0_11, %c0_12] : memref<64x64xbf16, #tpu.memory_space<vmem>>, vector<64x64xbf16>
    %36 = arith.truncf %34 : vector<64x512xf32> to vector<64x512xbf16>
    %cst_13 = arith.constant dense<0.000000e+00> : vector<64x512xf32>
    %37 = tpu.matmul %35, %36, %cst_13 {dimension_numbers = #tpu.dot_dimension_numbers<[1], [0], [0], [1], [0, 0, 1, 1], [], []>} : vector<64x64xbf16>, vector<64x512xbf16>, vector<64x512xf32> -> vector<64x512xf32>
    %38 = vector.extract_strided_slice %37 {offsets = [0, 0], sizes = [32, 512], strides = [1, 1]} : vector<64x512xf32> to vector<32x512xf32>
    %39 = vector.extract_strided_slice %37 {offsets = [32, 0], sizes = [32, 512], strides = [1, 1]} : vector<64x512xf32> to vector<32x512xf32>
    %40 = arith.mulf %38, %38 : vector<32x512xf32>
    %41 = arith.mulf %39, %39 : vector<32x512xf32>
    %42 = arith.addf %40, %41 : vector<32x512xf32>
    %43 = math.sqrt %42 : vector<32x512xf32>
    %44 = math.absf %38 : vector<32x512xf32>
    %45 = math.absf %39 : vector<32x512xf32>
    %46 = arith.maximumf %44, %45 : vector<32x512xf32>
    %47 = arith.minimumf %44, %45 : vector<32x512xf32>
    %cst_14 = arith.constant 1.000000e-30 : f32
    %48 = vector.broadcast %cst_14 : f32 to vector<32x512xf32>
    %49 = arith.maximumf %46, %48 : vector<32x512xf32>
    %50 = arith.divf %47, %49 : vector<32x512xf32>
    %51 = arith.mulf %50, %50 : vector<32x512xf32>
    %cst_15 = arith.constant -1.172120e-02 : f32
    %52 = vector.broadcast %cst_15 : f32 to vector<32x512xf32>
    %53 = arith.mulf %52, %51 : vector<32x512xf32>
    %cst_16 = arith.constant 0.0526533201 : f32
    %54 = vector.broadcast %cst_16 : f32 to vector<32x512xf32>
    %55 = arith.addf %53, %54 : vector<32x512xf32>
    %56 = arith.mulf %55, %51 : vector<32x512xf32>
    %cst_17 = arith.constant 0.116432868 : f32
    %57 = vector.broadcast %cst_17 : f32 to vector<32x512xf32>
    %58 = arith.subf %56, %57 : vector<32x512xf32>
    %59 = arith.mulf %58, %51 : vector<32x512xf32>
    %cst_18 = arith.constant 0.193543464 : f32
    %60 = vector.broadcast %cst_18 : f32 to vector<32x512xf32>
    %61 = arith.addf %59, %60 : vector<32x512xf32>
    %62 = arith.mulf %61, %51 : vector<32x512xf32>
    %cst_19 = arith.constant 0.332623482 : f32
    %63 = vector.broadcast %cst_19 : f32 to vector<32x512xf32>
    %64 = arith.subf %62, %63 : vector<32x512xf32>
    %65 = arith.mulf %64, %51 : vector<32x512xf32>
    %cst_20 = arith.constant 0.999977231 : f32
    %66 = vector.broadcast %cst_20 : f32 to vector<32x512xf32>
    %67 = arith.addf %65, %66 : vector<32x512xf32>
    %68 = arith.mulf %67, %50 : vector<32x512xf32>
    %69 = arith.cmpf ogt, %45, %44 : vector<32x512xf32>
    %cst_21 = arith.constant 1.57079637 : f32
    %70 = vector.broadcast %cst_21 : f32 to vector<32x512xf32>
    %71 = arith.subf %70, %68 : vector<32x512xf32>
    %72 = arith.select %69, %71, %68 : vector<32x512xi1>, vector<32x512xf32>
    %cst_22 = arith.constant 0.000000e+00 : f32
    %73 = vector.broadcast %cst_22 : f32 to vector<32x512xf32>
    %74 = arith.cmpf olt, %38, %73 : vector<32x512xf32>
    %cst_23 = arith.constant 3.14159274 : f32
    %75 = vector.broadcast %cst_23 : f32 to vector<32x512xf32>
    %76 = arith.subf %75, %72 : vector<32x512xf32>
    %77 = arith.select %74, %76, %72 : vector<32x512xi1>, vector<32x512xf32>
    %cst_24 = arith.constant 0.000000e+00 : f32
    %78 = vector.broadcast %cst_24 : f32 to vector<32x512xf32>
    %79 = arith.cmpf olt, %39, %78 : vector<32x512xf32>
    %cst_25 = arith.constant 0.000000e+00 : f32
    %80 = vector.broadcast %cst_25 : f32 to vector<32x512xf32>
    %81 = arith.subf %80, %77 : vector<32x512xf32>
    %82 = arith.select %79, %81, %77 : vector<32x512xi1>, vector<32x512xf32>
    %83 = tpu.concatenate %43, %82 in 1 : vector<32x512xf32>, vector<32x512xf32> -> vector<32x1024xf32>
    %c0_26 = arith.constant 0 : index
    %c0_27 = arith.constant 0 : index
    %84 = vector.load %arg7[%c0_26, %c0_27] : memref<16x32xbf16, #tpu.memory_space<vmem>>, vector<16x32xbf16>
    %85 = arith.truncf %83 : vector<32x1024xf32> to vector<32x1024xbf16>
    %cst_28 = arith.constant dense<0.000000e+00> : vector<16x1024xf32>
    %86 = tpu.matmul %84, %85, %cst_28 {dimension_numbers = #tpu.dot_dimension_numbers<[1], [0], [0], [1], [0, 0, 1, 1], [], []>} : vector<16x32xbf16>, vector<32x1024xbf16>, vector<16x1024xf32> -> vector<16x1024xf32>
    %87 = vector.extract_strided_slice %86 {offsets = [0, 0], sizes = [16, 128], strides = [1, 1]} : vector<16x1024xf32> to vector<16x128xf32>
    %88 = vector.extract_strided_slice %86 {offsets = [0, 128], sizes = [16, 128], strides = [1, 1]} : vector<16x1024xf32> to vector<16x128xf32>
    %89 = vector.extract_strided_slice %86 {offsets = [0, 256], sizes = [16, 128], strides = [1, 1]} : vector<16x1024xf32> to vector<16x128xf32>
    %90 = vector.extract_strided_slice %86 {offsets = [0, 384], sizes = [16, 128], strides = [1, 1]} : vector<16x1024xf32> to vector<16x128xf32>
    %91 = vector.extract_strided_slice %86 {offsets = [0, 512], sizes = [16, 128], strides = [1, 1]} : vector<16x1024xf32> to vector<16x128xf32>
    %92 = vector.extract_strided_slice %86 {offsets = [0, 640], sizes = [16, 128], strides = [1, 1]} : vector<16x1024xf32> to vector<16x128xf32>
    %93 = vector.extract_strided_slice %86 {offsets = [0, 768], sizes = [16, 128], strides = [1, 1]} : vector<16x1024xf32> to vector<16x128xf32>
    %94 = vector.extract_strided_slice %86 {offsets = [0, 896], sizes = [16, 128], strides = [1, 1]} : vector<16x1024xf32> to vector<16x128xf32>
    %95 = tpu.concatenate %87, %88, %89, %90, %91, %92, %93, %94 in 0 : vector<16x128xf32>, vector<16x128xf32>, vector<16x128xf32>, vector<16x128xf32>, vector<16x128xf32>, vector<16x128xf32>, vector<16x128xf32>, vector<16x128xf32> -> vector<128x128xf32>
    %96 = arith.truncf %95 : vector<128x128xf32> to vector<128x128xbf16>
    %c0_29 = arith.constant 0 : index
    %c0_30 = arith.constant 0 : index
    %97 = vector.load %arg8[%c0_29, %c0_30] : memref<128x64xbf16, #tpu.memory_space<vmem>>, vector<128x64xbf16>
    %cst_31 = arith.constant dense<0.000000e+00> : vector<128x64xf32>
    %98 = tpu.matmul %96, %97, %cst_31 {dimension_numbers = #tpu.dot_dimension_numbers<[1], [0], [0], [1], [0, 0, 1, 1], [], []>} : vector<128x128xbf16>, vector<128x64xbf16>, vector<128x64xf32> -> vector<128x64xf32>
    %99 = vector.extract_strided_slice %98 {offsets = [0, 0], sizes = [64, 64], strides = [1, 1]} : vector<128x64xf32> to vector<64x64xf32>
    %c0_32 = arith.constant 0 : index
    %c0_33 = arith.constant 0 : index
    %100 = vector.load %arg9[%c0_32, %c0_33] : memref<64x128xf32, #tpu.memory_space<vmem>>, vector<64x64xf32>
    tpu.vector_store %arg9[%c0_32, %c0_33], %99 {strides = array<i32>} : memref<64x128xf32, #tpu.memory_space<vmem>>, vector<64x64xf32>,
    %101 = vector.extract_strided_slice %98 {offsets = [64, 0], sizes = [64, 64], strides = [1, 1]} : vector<128x64xf32> to vector<64x64xf32>
    %c0_34 = arith.constant 0 : index
    %c64 = arith.constant 64 : index
    %102 = vector.load %arg9[%c0_34, %c64] : memref<64x128xf32, #tpu.memory_space<vmem>>, vector<64x64xf32>
    tpu.vector_store %arg9[%c0_34, %c64], %101 {strides = array<i32>} : memref<64x128xf32, #tpu.memory_space<vmem>>, vector<64x64xf32>,
    return
  }
  func.func @transform_0(%arg0: i32) -> (i32, i32) {
    %c0_i32 = arith.constant 0 : i32
    %c0_i32_0 = arith.constant 0 : i32
    %c0_i32_1 = arith.constant 0 : i32
    return %c0_i32, %c0_i32_0 : i32, i32
  }
  func.func @transform_1(%arg0: i32) -> (i32, i32) {
    %c0_i32 = arith.constant 0 : i32
    %c0_i32_0 = arith.constant 0 : i32
    %c0_i32_1 = arith.constant 0 : i32
    return %c0_i32, %c0_i32_0 : i32, i32
  }
  func.func @transform_2(%arg0: i32) -> (i32, i32, i32) {
    %c0_i32 = arith.constant 0 : i32
    %c0_i32_0 = arith.constant 0 : i32
    %c0_i32_1 = arith.constant 0 : i32
    return %arg0, %c0_i32, %c0_i32_0 : i32, i32, i32
  }
  func.func @transform_3(%arg0: i32) -> (i32, i32, i32) {
    %c0_i32 = arith.constant 0 : i32
    %c0_i32_0 = arith.constant 0 : i32
    %c0_i32_1 = arith.constant 0 : i32
    return %arg0, %c0_i32, %c0_i32_0 : i32, i32, i32
  }
  func.func @transform_4(%arg0: i32) -> (i32, i32) {
    %c0_i32 = arith.constant 0 : i32
    %c0_i32_0 = arith.constant 0 : i32
    %c0_i32_1 = arith.constant 0 : i32
    return %c0_i32, %c0_i32_0 : i32, i32
  }
  func.func @transform_5(%arg0: i32) -> (i32, i32) {
    %c0_i32 = arith.constant 0 : i32
    %c0_i32_0 = arith.constant 0 : i32
    %c0_i32_1 = arith.constant 0 : i32
    return %c0_i32, %c0_i32_0 : i32, i32
  }
  func.func @transform_6(%arg0: i32) -> (i32, i32) {
    %c0_i32 = arith.constant 0 : i32
    %c0_i32_0 = arith.constant 0 : i32
    %c0_i32_1 = arith.constant 0 : i32
    return %c0_i32, %c0_i32_0 : i32, i32
  }
  func.func @transform_7(%arg0: i32) -> (i32, i32) {
    %c0_i32 = arith.constant 0 : i32
    %c0_i32_0 = arith.constant 0 : i32
    %c0_i32_1 = arith.constant 0 : i32
    return %c0_i32, %c0_i32_0 : i32, i32
  }
  func.func @transform_8(%arg0: i32) -> (i32, i32) {
    %c0_i32 = arith.constant 0 : i32
    %c0_i32_0 = arith.constant 0 : i32
    return %arg0, %c0_i32 : i32, i32
  }
}

</mosaic_0001>

<llo_original>
// kernel: custom-call
$region0: #{custom-call}
  %s0 = inlined_call_operand.vmem [shape: f32[8,16,64], index: 0, kind: input, shape index: {}]
  %s1 = inlined_call_operand.vmem [shape: f32[8,16,64], index: 1, kind: input, shape index: {}]
  %s2 = inlined_call_operand.hbm [shape: c64[8,16,64], index: 2, kind: output, shape index: {}]
  %s3 = scalar_lea.hbm %s2, 128
  $region1: #{custom-call} parent=0
    #allocation0 [shape = 's32[1]{0}', space=sflag, size = 0x4, scoped, tag = 'scoped memory for custom-call']
    %4 = vsyncpa [#allocation0], 0
    %s6 = sshll.u32 %s0, 4
    %s7 = int_to_ptr.vmem [resolvable:$true] %s6
    %s8 = sshll.u32 %s2, 4
    %s9 = int_to_ptr.hbm [resolvable:$true] %s8
    %11 = dma.vmem_to_hbm [thread:$0]  %s7, 2048, %s9, [#allocation0]
    %13 = dma.done [#allocation0], 2048
    %14 = vsyncpa [#allocation0], 1
  $region2: #{custom-call} parent=0
    #allocation1 [shape = 's32[1]{0}', space=sflag, size = 0x4, scoped, tag = 'scoped memory for custom-call']
    %15 = vsyncpa [#allocation1], 0
    %s17 = sshll.u32 %s1, 4
    %s18 = int_to_ptr.vmem [resolvable:$true] %s17
    %s19 = sshll.u32 %s3, 4
    %s20 = int_to_ptr.hbm [resolvable:$true] %s19
    %22 = dma.vmem_to_hbm [thread:$0]  %s18, 2048, %s20, [#allocation1]
    %24 = dma.done [#allocation1], 2048
    %25 = vsyncpa [#allocation1], 1

// kernel: _forward_impl.1
$region0: #{_forward_impl.1}
  #allocation0 [shape = 'u32[]', space=smem, size = 0x4, offset = 0x4, fixed_abs, tag = 'smem constant byte address 0x4 - core index']
  #allocation1 [shape = 'u32[72,128]{1,0:T(1,128)}', space=vmem, size = 0x9000, scoped, tag = 'internal scratch']
  %s0 = inlined_call_operand.vmem [shape: f32[32,128], index: 0, kind: input, shape index: {}]
  %s1 = inlined_call_operand.vmem [shape: f32[32,128], index: 1, kind: input, shape index: {}]
  %s2 = inlined_call_operand.vmem [shape: f32[8,32,128], index: 2, kind: input, shape index: {}]
  %s3 = inlined_call_operand.vmem [shape: f32[8,32,128], index: 3, kind: input, shape index: {}]
  %s4 = inlined_call_operand.vmem [shape: bf16[256,256], index: 4, kind: input, shape index: {}]
  %s5 = inlined_call_operand.vmem [shape: bf16[64,64], index: 5, kind: input, shape index: {}]
  %s6 = inlined_call_operand.vmem [shape: bf16[16,32], index: 6, kind: input, shape index: {}]
  %s7 = inlined_call_operand.vmem [shape: bf16[128,64], index: 7, kind: input, shape index: {}]
  %s8 = inlined_call_operand.vmem [shape: f32[128,128], index: 8, kind: output, shape index: {}]
  %s9 = sld [smem:[#allocation0]]
  $region65: #{_forward_impl.1} parent=0
    _
  %s11 = ssub.s32 1, %s9
  %s12 = scalar_select 0, %s11, %s9
  loop: start=0, step=1, limit=4
  $region2: #{_forward_impl.1} parent=0 // loop_pre_header
    _
  $region3: #{_forward_impl.1} parent=0 // loop_header
    %s14 = sphi 0, %s18
    %p15 = scmp.ge.s32.totalorder %s14, 4
    %s22 = sphi 0, %s22
    %s24 = sphi 0, %s22
    %s25 = sphi 0, %s24
    %s39 = sphi 0, %s25
    %s43 = sphi 0, %s43
    %s45 = sphi 0, %s43
    %s46 = sphi 0, %s45
    %s60 = sphi 0, %s46
    %s66 = sphi 0, %s68
    %s69 = sphi 0, %s66
    %s70 = sphi 0, %s69
    %s86 = sphi 0, %s70
    %s92 = sphi 0, %s94
    %s95 = sphi 0, %s92
    %s96 = sphi 0, %s95
    %s112 = sphi 0, %s96
    %s116 = sphi 0, %s116
    %s118 = sphi 0, %s116
    %s119 = sphi 0, %s118
    %s133 = sphi 0, %s119
    %s137 = sphi 0, %s137
    %s139 = sphi 0, %s137
    %s140 = sphi 0, %s139
    %s154 = sphi 0, %s140
    %s158 = sphi 0, %s158
    %s160 = sphi 0, %s158
    %s161 = sphi 0, %s160
    %s175 = sphi 0, %s161
    %s179 = sphi 0, %s179
    %s181 = sphi 0, %s179
    %s182 = sphi 0, %s181
    %s196 = sphi 0, %s182
    %s202 = sphi 0, %s204
    %s205 = sphi 0, %s202
    %s206 = sphi 0, %s205
    %s222 = sphi 0, %s206
  $region4: #{_forward_impl.1} parent=0 // loop_header_branch
    %17 = sbr.rel (%p15) target = $region8
  $region5: #{_forward_impl.1} parent=0 // loop_body
    %s19 = ssub.s32 %s14, 1
    %s20 = ssub.s32 %s14, 2
    %s21 = sadd.s32 %s14, 1
    %s23 = sadd.s32 %s22, 1
    %p26 = scmp.eq.s32.totalorder %s14, 1
    %p27 = scmp.ne.s32.totalorder %s22, %s24
    %p28 = scmp.eq.s32.totalorder %s14, 0
    %p29 = por %p27, %p28
    %p30 = scmp.ne.s32.totalorder %s22, %s24
    %p31 = scmp.eq.s32.totalorder %s19, 1
    %p32 = por %p30, %p31
    %p33 = scmp.ne.s32.totalorder %s24, %s25
    %p34 = scmp.eq.s32.totalorder %s19, 0
    %p35 = por %p33, %p34
    %p36 = scmp.ne.s32.totalorder %s24, %s25
    %p37 = scmp.eq.s32.totalorder %s20, 1
    %p38 = por %p36, %p37
    %p40 = scmp.ne.s32.totalorder %s25, %s39
    %p41 = scmp.eq.s32.totalorder %s20, 0
    %p42 = por %p40, %p41
    %s44 = sadd.s32 %s43, 1
    %p47 = scmp.eq.s32.totalorder %s14, 1
    %p48 = scmp.ne.s32.totalorder %s43, %s45
    %p49 = scmp.eq.s32.totalorder %s14, 0
    %p50 = por %p48, %p49
    %p51 = scmp.ne.s32.totalorder %s43, %s45
    %p52 = scmp.eq.s32.totalorder %s19, 1
    %p53 = por %p51, %p52
    %p54 = scmp.ne.s32.totalorder %s45, %s46
    %p55 = scmp.eq.s32.totalorder %s19, 0
    %p56 = por %p54, %p55
    %p57 = scmp.ne.s32.totalorder %s45, %s46
    %p58 = scmp.eq.s32.totalorder %s20, 1
    %p59 = por %p57, %p58
    %p61 = scmp.ne.s32.totalorder %s46, %s60
    %p62 = scmp.eq.s32.totalorder %s20, 0
    %p63 = por %p61, %p62
    %s64 = ssub.s32 %s14, %s21
    %p65 = scmp.eq.s32.totalorder %s64, 0
    %s67 = sadd.s32 %s66, 1
    %s68 = scalar_select %p65, %s66, %s67
    %p71 = pneg %p65
    %p72 = scmp.eq.s32.totalorder %s14, 1
    %p73 = por %p71, %p72
    %p74 = scmp.ne.s32.totalorder %s66, %s69
    %p75 = scmp.eq.s32.totalorder %s14, 0
    %p76 = por %p74, %p75
    %p77 = scmp.ne.s32.totalorder %s66, %s69
    %p78 = scmp.eq.s32.totalorder %s19, 1
    %p79 = por %p77, %p78
    %p80 = scmp.ne.s32.totalorder %s69, %s70
    %p81 = scmp.eq.s32.totalorder %s19, 0
    %p82 = por %p80, %p81
    %p83 = scmp.ne.s32.totalorder %s69, %s70
    %p84 = scmp.eq.s32.totalorder %s20, 1
    %p85 = por %p83, %p84
    %p87 = scmp.ne.s32.totalorder %s70, %s86
    %p88 = scmp.eq.s32.totalorder %s20, 0
    %p89 = por %p87, %p88
    %s90 = ssub.s32 %s14, %s21
    %p91 = scmp.eq.s32.totalorder %s90, 0
    %s93 = sadd.s32 %s92, 1
    %s94 = scalar_select %p91, %s92, %s93
    %p97 = pneg %p91
    %p98 = scmp.eq.s32.totalorder %s14, 1
    %p99 = por %p97, %p98
    %p100 = scmp.ne.s32.totalorder %s92, %s95
    %p101 = scmp.eq.s32.totalorder %s14, 0
    %p102 = por %p100, %p101
    %p103 = scmp.ne.s32.totalorder %s92, %s95
    %p104 = scmp.eq.s32.totalorder %s19, 1
    %p105 = por %p103, %p104
    %p106 = scmp.ne.s32.totalorder %s95, %s96
    %p107 = scmp.eq.s32.totalorder %s19, 0
    %p108 = por %p106, %p107
    %p109 = scmp.ne.s32.totalorder %s95, %s96
    %p110 = scmp.eq.s32.totalorder %s20, 1
    %p111 = por %p109, %p110
    %p113 = scmp.ne.s32.totalorder %s96, %s112
    %p114 = scmp.eq.s32.totalorder %s20, 0
    %p115 = por %p113, %p114
    %s117 = sadd.s32 %s116, 1
    %p120 = scmp.eq.s32.totalorder %s14, 1
    %p121 = scmp.ne.s32.totalorder %s116, %s118
    %p122 = scmp.eq.s32.totalorder %s14, 0
    %p123 = por %p121, %p122
    %p124 = scmp.ne.s32.totalorder %s116, %s118
    %p125 = scmp.eq.s32.totalorder %s19, 1
    %p126 = por %p124, %p125
    %p127 = scmp.ne.s32.totalorder %s118, %s119
    %p128 = scmp.eq.s32.totalorder %s19, 0
    %p129 = por %p127, %p128
    %p130 = scmp.ne.s32.totalorder %s118, %s119
    %p131 = scmp.eq.s32.totalorder %s20, 1
    %p132 = por %p130, %p131
    %p134 = scmp.ne.s32.totalorder %s119, %s133
    %p135 = scmp.eq.s32.totalorder %s20, 0
    %p136 = por %p134, %p135
    %s138 = sadd.s32 %s137, 1
    %p141 = scmp.eq.s32.totalorder %s14, 1
    %p142 = scmp.ne.s32.totalorder %s137, %s139
    %p143 = scmp.eq.s32.totalorder %s14, 0
    %p144 = por %p142, %p143
    %p145 = scmp.ne.s32.totalorder %s137, %s139
    %p146 = scmp.eq.s32.totalorder %s19, 1
    %p147 = por %p145, %p146
    %p148 = scmp.ne.s32.totalorder %s139, %s140
    %p149 = scmp.eq.s32.totalorder %s19, 0
    %p150 = por %p148, %p149
    %p151 = scmp.ne.s32.totalorder %s139, %s140
    %p152 = scmp.eq.s32.totalorder %s20, 1
    %p153 = por %p151, %p152
    %p155 = scmp.ne.s32.totalorder %s140, %s154
    %p156 = scmp.eq.s32.totalorder %s20, 0
    %p157 = por %p155, %p156
    %s159 = sadd.s32 %s158, 1
    %p162 = scmp.eq.s32.totalorder %s14, 1
    %p163 = scmp.ne.s32.totalorder %s158, %s160
    %p164 = scmp.eq.s32.totalorder %s14, 0
    %p165 = por %p163, %p164
    %p166 = scmp.ne.s32.totalorder %s158, %s160
    %p167 = scmp.eq.s32.totalorder %s19, 1
    %p168 = por %p166, %p167
    %p169 = scmp.ne.s32.totalorder %s160, %s161
    %p170 = scmp.eq.s32.totalorder %s19, 0
    %p171 = por %p169, %p170
    %p172 = scmp.ne.s32.totalorder %s160, %s161
    %p173 = scmp.eq.s32.totalorder %s20, 1
    %p174 = por %p172, %p173
    %p176 = scmp.ne.s32.totalorder %s161, %s175
    %p177 = scmp.eq.s32.totalorder %s20, 0
    %p178 = por %p176, %p177
    %s180 = sadd.s32 %s179, 1
    %p183 = scmp.eq.s32.totalorder %s14, 1
    %p184 = scmp.ne.s32.totalorder %s179, %s181
    %p185 = scmp.eq.s32.totalorder %s14, 0
    %p186 = por %p184, %p185
    %p187 = scmp.ne.s32.totalorder %s179, %s181
    %p188 = scmp.eq.s32.totalorder %s19, 1
    %p189 = por %p187, %p188
    %p190 = scmp.ne.s32.totalorder %s181, %s182
    %p191 = scmp.eq.s32.totalorder %s19, 0
    %p192 = por %p190, %p191
    %p193 = scmp.ne.s32.totalorder %s181, %s182
    %p194 = scmp.eq.s32.totalorder %s20, 1
    %p195 = por %p193, %p194
    %p197 = scmp.ne.s32.totalorder %s182, %s196
    %p198 = scmp.eq.s32.totalorder %s20, 0
    %p199 = por %p197, %p198
    %s200 = ssub.s32 %s14, %s21
    %p201 = scmp.eq.s32.totalorder %s200, 0
    %s203 = sadd.s32 %s202, 1
    %s204 = scalar_select %p201, %s202, %s203
    %p207 = pneg %p201
    %p208 = scmp.eq.s32.totalorder %s14, 1
    %p209 = por %p207, %p208
    %p210 = scmp.ne.s32.totalorder %s202, %s205
    %p211 = scmp.eq.s32.totalorder %s14, 0
    %p212 = por %p210, %p211
    %p213 = scmp.ne.s32.totalorder %s202, %s205
    %p214 = scmp.eq.s32.totalorder %s19, 1
    %p215 = por %p213, %p214
    %p216 = scmp.ne.s32.totalorder %s205, %s206
    %p217 = scmp.eq.s32.totalorder %s19, 0
    %p218 = por %p216, %p217
    %p219 = scmp.ne.s32.totalorder %s205, %s206
    %p220 = scmp.eq.s32.totalorder %s20, 1
    %p221 = por %p219, %p220
    %p223 = scmp.ne.s32.totalorder %s206, %s222
    %p224 = scmp.eq.s32.totalorder %s20, 0
    %p225 = por %p223, %p224
    %p226 = scmp.le.s32.totalorder 1, %s14
    %p227 = scmp.lt.s32.totalorder %s14, 3
    %p228 = pnand %p226, %p227
    %p229 = pneg %p228
    // Predicated region
    $region9: #{_forward_impl.1} parent=5 // pred_check
      _
    $region10: #{_forward_impl.1} parent=5 // pred_check_branch
      %231 = sbr.rel (%p228) target = $region12
    $region11: #{_forward_impl.1} parent=5 // pred_region
      %s232 = ssub.s32 %s14, 1
      // Predicated region
      $region13: #{_forward_impl.1} parent=11 // pred_check
        %p233 = pneg %p35
      $region14: #{_forward_impl.1} parent=11 // pred_check_branch
        %235 = sbr.rel (%p233) target = $region16
      $region15: #{_forward_impl.1} parent=11 // pred_region
        _
      $region16: #{_forward_impl.1} parent=11 // pred_fallthru
        _
      // Predicated region
      $region17: #{_forward_impl.1} parent=11 // pred_check
        %p236 = pneg %p56
      $region18: #{_forward_impl.1} parent=11 // pred_check_branch
        %238 = sbr.rel (%p236) target = $region20
      $region19: #{_forward_impl.1} parent=11 // pred_region
        _
      $region20: #{_forward_impl.1} parent=11 // pred_fallthru
        _
      // Predicated region
      $region21: #{_forward_impl.1} parent=11 // pred_check
        %p239 = pneg %p129
      $region22: #{_forward_impl.1} parent=11 // pred_check_branch
        %241 = sbr.rel (%p239) target = $region24
      $region23: #{_forward_impl.1} parent=11 // pred_region
        _
      $region24: #{_forward_impl.1} parent=11 // pred_fallthru
        _
      // Predicated region
      $region25: #{_forward_impl.1} parent=11 // pred_check
        %p242 = pneg %p150
      $region26: #{_forward_impl.1} parent=11 // pred_check_branch
        %244 = sbr.rel (%p242) target = $region28
      $region27: #{_forward_impl.1} parent=11 // pred_region
        _
      $region28: #{_forward_impl.1} parent=11 // pred_fallthru
        _
      // Predicated region
      $region29: #{_forward_impl.1} parent=11 // pred_check
        %p245 = pneg %p171
      $region30: #{_forward_impl.1} parent=11 // pred_check_branch
        %247 = sbr.rel (%p245) target = $region32
      $region31: #{_forward_impl.1} parent=11 // pred_region
        _
      $region32: #{_forward_impl.1} parent=11 // pred_fallthru
        _
      // Predicated region
      $region33: #{_forward_impl.1} parent=11 // pred_check
        %p248 = pneg %p192
      $region34: #{_forward_impl.1} parent=11 // pred_check_branch
        %250 = sbr.rel (%p248) target = $region36
      $region35: #{_forward_impl.1} parent=11 // pred_region
        _
      $region36: #{_forward_impl.1} parent=11 // pred_fallthru
        _
    $region12: #{_forward_impl.1} parent=5 // pred_fallthru
      _
    %p251 = scmp.lt.s32.totalorder %s14, 2
    // Predicated region
    $region37: #{_forward_impl.1} parent=5 // pred_check
      %p252 = pneg %p251
    $region38: #{_forward_impl.1} parent=5 // pred_check_branch
      %254 = sbr.rel (%p252) target = $region40
    $region39: #{_forward_impl.1} parent=5 // pred_region
      // Predicated region
      $region41: #{_forward_impl.1} parent=39 // pred_check
        %p255 = pneg %p76
      $region42: #{_forward_impl.1} parent=39 // pred_check_branch
        %257 = sbr.rel (%p255) target = $region44
      $region43: #{_forward_impl.1} parent=39 // pred_region
        %s258 = smul.u32 4, %s14
        %p259 = scmp.lt.s32.totalorder %s258, 7
        %s260 = scalar_select %p259, %s258, 7
        %s261 = smul.addr %s260, 4
        %s262 = smul.addr %s261, 8
        %s263 = scalar_lea.vmem %s2, %s262
        %s264 = smul.u32 4, %s14
      $region44: #{_forward_impl.1} parent=39 // pred_fallthru
        _
      // Predicated region
      $region45: #{_forward_impl.1} parent=39 // pred_check
        %p265 = pneg %p102
      $region46: #{_forward_impl.1} parent=39 // pred_check_branch
        %267 = sbr.rel (%p265) target = $region48
      $region47: #{_forward_impl.1} parent=39 // pred_region
        %s268 = smul.u32 4, %s14
        %p269 = scmp.lt.s32.totalorder %s268, 7
        %s270 = scalar_select %p269, %s268, 7
        %s271 = smul.addr %s270, 4
        %s272 = smul.addr %s271, 8
        %s273 = scalar_lea.vmem %s3, %s272
        %s274 = smul.u32 4, %s14
      $region48: #{_forward_impl.1} parent=39 // pred_fallthru
        _
    $region40: #{_forward_impl.1} parent=5 // pred_fallthru
      _
    %p275 = scmp.le.s32.totalorder 1, %s14
    %p276 = scmp.lt.s32.totalorder %s14, 3
    %p277 = pnand %p275, %p276
    %p278 = pneg %p277
    // Predicated region
    $region49: #{_forward_impl.1} parent=5 // pred_check
      _
    $region50: #{_forward_impl.1} parent=5 // pred_check_branch
      %280 = sbr.rel (%p277) target = $region52
    $region51: #{_forward_impl.1} parent=5 // pred_region
      %s281 = ssub.s32 %s14, 1
      %p282 = pneg %p35
      %p283 = pneg %p32
      %p284 = pneg %p56
      %p285 = pneg %p53
      %s286 = smul.u32 4, %s19
      %p287 = scmp.lt.s32.totalorder %s286, 7
      %s288 = scalar_select %p287, %s286, 7
      %s289 = smul.addr %s288, 4
      %s290 = smul.addr %s289, 8
      %s291 = scalar_lea.vmem %s2, %s290
      %p292 = pneg %p82
      %p293 = pneg %p79
      %s294 = smul.u32 4, %s19
      %p295 = scmp.lt.s32.totalorder %s294, 7
      %s296 = scalar_select %p295, %s294, 7
      %s297 = smul.addr %s296, 4
      %s298 = smul.addr %s297, 8
      %s299 = scalar_lea.vmem %s3, %s298
      %p300 = pneg %p108
      %p301 = pneg %p105
      %p302 = pneg %p129
      %p303 = pneg %p126
      %p304 = pneg %p150
      %p305 = pneg %p147
      %p306 = pneg %p171
      %p307 = pneg %p168
      %p308 = pneg %p192
      %p309 = pneg %p189
      %p310 = pneg %p218
      %p311 = pneg %p215
      %s312 = smul.u32 8, %s19
      %p313 = scmp.lt.s32.totalorder %s312, 15
      %s314 = scalar_select %p313, %s312, 15
      %s315 = smul.addr %s314, 8
      %s316 = scalar_lea.vmem %s8, %s315
      %s317 = smul.u32 4, %s19
      %p318 = scmp.lt.s32.totalorder %s317, 7
      %s319 = scalar_select %p318, %s317, 7
      %s320 = smul.addr %s319, 4
      %s321 = smul.addr %s320, 8
      %s322 = scalar_lea.vmem %s2, %s321
      %s323 = smul.u32 4, %s19
      %s324 = smul.u32 4, %s19
      %p325 = scmp.lt.s32.totalorder %s324, 7
      %s326 = scalar_select %p325, %s324, 7
      %s327 = smul.addr %s326, 4
      %s328 = smul.addr %s327, 8
      %s329 = scalar_lea.vmem %s3, %s328
      %s330 = smul.u32 4, %s19
      %s331 = smul.u32 8, %s19
      %p332 = scmp.lt.s32.totalorder %s331, 15
      %s333 = scalar_select %p332, %s331, 15
      %s334 = smul.addr %s333, 8
      %s335 = scalar_lea.vmem %s8, %s334
      %s336 = smul.u32 8, %s19
      %v338 = vld [vmem:[%s0] sm:$0xff]
      %v339 = vld [vmem:[%s0 + $0x8] sm:$0xff]
      %v340 = vld [vmem:[%s0 + $0x10] sm:$0xff]
      %v341 = vld [vmem:[%s0 + $0x18] sm:$0xff]
      %v342 = vld [vmem:[%s1] sm:$0xff]
      %v343 = vld [vmem:[%s1 + $0x8] sm:$0xff]
      %v344 = vld [vmem:[%s1 + $0x10] sm:$0xff]
      %v345 = vld [vmem:[%s1 + $0x18] sm:$0xff]
      %v346 = vld [vmem:[%s322] sm:$0xff]
      %v347 = vld [vmem:[%s322 + $0x8] sm:$0xff]
      %v348 = vld [vmem:[%s322 + $0x10] sm:$0xff]
      %v349 = vld [vmem:[%s322 + $0x18] sm:$0xff]
      %v350 = vld [vmem:[%s322 + $0x20] sm:$0xff]
      %v351 = vld [vmem:[%s322 + $0x28] sm:$0xff]
      %v352 = vld [vmem:[%s322 + $0x30] sm:$0xff]
      %v353 = vld [vmem:[%s322 + $0x38] sm:$0xff]
      %v354 = vld [vmem:[%s322 + $0x40] sm:$0xff]
      %v355 = vld [vmem:[%s322 + $0x48] sm:$0xff]
      %v356 = vld [vmem:[%s322 + $0x50] sm:$0xff]
      %v357 = vld [vmem:[%s322 + $0x58] sm:$0xff]
      %v358 = vld [vmem:[%s322 + $0x60] sm:$0xff]
      %v359 = vld [vmem:[%s322 + $0x68] sm:$0xff]
      %v360 = vld [vmem:[%s322 + $0x70] sm:$0xff]
      %v361 = vld [vmem:[%s322 + $0x78] sm:$0xff]
      %v362 = vld [vmem:[%s329] sm:$0xff]
      %v363 = vld [vmem:[%s329 + $0x8] sm:$0xff]
      %v364 = vld [vmem:[%s329 + $0x10] sm:$0xff]
      %v365 = vld [vmem:[%s329 + $0x18] sm:$0xff]
      %v366 = vld [vmem:[%s329 + $0x20] sm:$0xff]
      %v367 = vld [vmem:[%s329 + $0x28] sm:$0xff]
      %v368 = vld [vmem:[%s329 + $0x30] sm:$0xff]
      %v369 = vld [vmem:[%s329 + $0x38] sm:$0xff]
      %v370 = vld [vmem:[%s329 + $0x40] sm:$0xff]
      %v371 = vld [vmem:[%s329 + $0x48] sm:$0xff]
      %v372 = vld [vmem:[%s329 + $0x50] sm:$0xff]
      %v373 = vld [vmem:[%s329 + $0x58] sm:$0xff]
      %v374 = vld [vmem:[%s329 + $0x60] sm:$0xff]
      %v375 = vld [vmem:[%s329 + $0x68] sm:$0xff]
      %v376 = vld [vmem:[%s329 + $0x70] sm:$0xff]
      %v377 = vld [vmem:[%s329 + $0x78] sm:$0xff]
      %v378 = vmul.f32 %v338, %v346
      %v379 = vmul.f32 %v339, %v347
      %v380 = vmul.f32 %v340, %v348
      %v381 = vmul.f32 %v341, %v349
      %v382 = vmul.f32 %v338, %v350
      %v383 = vmul.f32 %v339, %v351
      %v384 = vmul.f32 %v340, %v352
      %v385 = vmul.f32 %v341, %v353
      %v386 = vmul.f32 %v338, %v354
      %v387 = vmul.f32 %v339, %v355
      %v388 = vmul.f32 %v340, %v356
      %v389 = vmul.f32 %v341, %v357
      %v390 = vmul.f32 %v338, %v358
      %v391 = vmul.f32 %v339, %v359
      %v392 = vmul.f32 %v340, %v360
      %v393 = vmul.f32 %v341, %v361
      %v394 = vmul.f32 %v342, %v362
      %v395 = vmul.f32 %v343, %v363
      %v396 = vmul.f32 %v344, %v364
      %v397 = vmul.f32 %v345, %v365
      %v398 = vmul.f32 %v342, %v366
      %v399 = vmul.f32 %v343, %v367
      %v400 = vmul.f32 %v344, %v368
      %v401 = vmul.f32 %v345, %v369
      %v402 = vmul.f32 %v342, %v370
      %v403 = vmul.f32 %v343, %v371
      %v404 = vmul.f32 %v344, %v372
      %v405 = vmul.f32 %v345, %v373
      %v406 = vmul.f32 %v342, %v374
      %v407 = vmul.f32 %v343, %v375
      %v408 = vmul.f32 %v344, %v376
      %v409 = vmul.f32 %v345, %v377
      %v410 = vsub.f32 %v378, %v394
      %v411 = vsub.f32 %v379, %v395
      %v412 = vsub.f32 %v380, %v396
      %v413 = vsub.f32 %v381, %v397
      %v414 = vsub.f32 %v382, %v398
      %v415 = vsub.f32 %v383, %v399
      %v416 = vsub.f32 %v384, %v400
      %v417 = vsub.f32 %v385, %v401
      %v418 = vsub.f32 %v386, %v402
      %v419 = vsub.f32 %v387, %v403
      %v420 = vsub.f32 %v388, %v404
      %v421 = vsub.f32 %v389, %v405
      %v422 = vsub.f32 %v390, %v406
      %v423 = vsub.f32 %v391, %v407
      %v424 = vsub.f32 %v392, %v408
      %v425 = vsub.f32 %v393, %v409
      %v426 = vmul.f32 %v338, %v362
      %v427 = vmul.f32 %v339, %v363
      %v428 = vmul.f32 %v340, %v364
      %v429 = vmul.f32 %v341, %v365
      %v430 = vmul.f32 %v338, %v366
      %v431 = vmul.f32 %v339, %v367
      %v432 = vmul.f32 %v340, %v368
      %v433 = vmul.f32 %v341, %v369
      %v434 = vmul.f32 %v338, %v370
      %v435 = vmul.f32 %v339, %v371
      %v436 = vmul.f32 %v340, %v372
      %v437 = vmul.f32 %v341, %v373
      %v438 = vmul.f32 %v338, %v374
      %v439 = vmul.f32 %v339, %v375
      %v440 = vmul.f32 %v340, %v376
      %v441 = vmul.f32 %v341, %v377
      %v442 = vmul.f32 %v342, %v346
      %v443 = vmul.f32 %v343, %v347
      %v444 = vmul.f32 %v344, %v348
      %v445 = vmul.f32 %v345, %v349
      %v446 = vmul.f32 %v342, %v350
      %v447 = vmul.f32 %v343, %v351
      %v448 = vmul.f32 %v344, %v352
      %v449 = vmul.f32 %v345, %v353
      %v450 = vmul.f32 %v342, %v354
      %v451 = vmul.f32 %v343, %v355
      %v452 = vmul.f32 %v344, %v356
      %v453 = vmul.f32 %v345, %v357
      %v454 = vmul.f32 %v342, %v358
      %v455 = vmul.f32 %v343, %v359
      %v456 = vmul.f32 %v344, %v360
      %v457 = vmul.f32 %v345, %v361
      %v458 = vadd.f32 %v426, %v442
      %v459 = vadd.f32 %v427, %v443
      %v460 = vadd.f32 %v428, %v444
      %v461 = vadd.f32 %v429, %v445
      %v462 = vadd.f32 %v430, %v446
      %v463 = vadd.f32 %v431, %v447
      %v464 = vadd.f32 %v432, %v448
      %v465 = vadd.f32 %v433, %v449
      %v466 = vadd.f32 %v434, %v450
      %v467 = vadd.f32 %v435, %v451
      %v468 = vadd.f32 %v436, %v452
      %v469 = vadd.f32 %v437, %v453
      %v470 = vadd.f32 %v438, %v454
      %v471 = vadd.f32 %v439, %v455
      %v472 = vadd.f32 %v440, %v456
      %v473 = vadd.f32 %v441, %v457
      %v474 = vpack.c.bf16 %v411, %v410
      %v475 = vpack.c.bf16 %v459, %v458
      %v476 = vpack.c.bf16 %v413, %v412
      %v477 = vpack.c.bf16 %v461, %v460
      %v478 = vpack.c.bf16 %v415, %v414
      %v479 = vpack.c.bf16 %v463, %v462
      %v480 = vpack.c.bf16 %v417, %v416
      %v481 = vpack.c.bf16 %v465, %v464
      %v482 = vpack.c.bf16 %v419, %v418
      %v483 = vpack.c.bf16 %v467, %v466
      %v484 = vpack.c.bf16 %v421, %v420
      %v485 = vpack.c.bf16 %v469, %v468
      %v486 = vpack.c.bf16 %v423, %v422
      %v487 = vpack.c.bf16 %v471, %v470
      %v488 = vpack.c.bf16 %v425, %v424
      %v489 = vpack.c.bf16 %v473, %v472
      %v490 = vld [vmem:[%s4] sm:$0xff]
      %v491 = vld [vmem:[%s4 + $0x8] sm:$0xff]
      %v492 = vld [vmem:[%s4 + $0x10] sm:$0xff]
      %v493 = vld [vmem:[%s4 + $0x18] sm:$0xff]
      %v494 = vld [vmem:[%s4 + $0x20] sm:$0xff]
      %v495 = vld [vmem:[%s4 + $0x28] sm:$0xff]
      %v496 = vld [vmem:[%s4 + $0x30] sm:$0xff]
      %v497 = vld [vmem:[%s4 + $0x38] sm:$0xff]
      %v498 = vld [vmem:[%s4 + $0x40] sm:$0xff]
      %v499 = vld [vmem:[%s4 + $0x48] sm:$0xff]
      %v500 = vld [vmem:[%s4 + $0x50] sm:$0xff]
      %v501 = vld [vmem:[%s4 + $0x58] sm:$0xff]
      %v502 = vld [vmem:[%s4 + $0x60] sm:$0xff]
      %v503 = vld [vmem:[%s4 + $0x68] sm:$0xff]
      %v504 = vld [vmem:[%s4 + $0x70] sm:$0xff]
      %v505 = vld [vmem:[%s4 + $0x78] sm:$0xff]
      %v506 = vld [vmem:[%s4 + $0x80] sm:$0xff]
      %v507 = vld [vmem:[%s4 + $0x88] sm:$0xff]
      %v508 = vld [vmem:[%s4 + $0x90] sm:$0xff]
      %v509 = vld [vmem:[%s4 + $0x98] sm:$0xff]
      %v510 = vld [vmem:[%s4 + $0xa0] sm:$0xff]
      %v511 = vld [vmem:[%s4 + $0xa8] sm:$0xff]
      %v512 = vld [vmem:[%s4 + $0xb0] sm:$0xff]
      %v513 = vld [vmem:[%s4 + $0xb8] sm:$0xff]
      %v514 = vld [vmem:[%s4 + $0xc0] sm:$0xff]
      %v515 = vld [vmem:[%s4 + $0xc8] sm:$0xff]
      %v516 = vld [vmem:[%s4 + $0xd0] sm:$0xff]
      %v517 = vld [vmem:[%s4 + $0xd8] sm:$0xff]
      %v518 = vld [vmem:[%s4 + $0xe0] sm:$0xff]
      %v519 = vld [vmem:[%s4 + $0xe8] sm:$0xff]
      %v520 = vld [vmem:[%s4 + $0xf0] sm:$0xff]
      %v521 = vld [vmem:[%s4 + $0xf8] sm:$0xff]
      %v554 = vunpack.c.l.b16 %v490
      %v555 = vunpack.c.h.b16 %v490
      %v556 = vunpack.c.l.b16 %v491
      %v557 = vunpack.c.h.b16 %v491
      %v558 = vunpack.c.l.b16 %v492
      %v559 = vunpack.c.h.b16 %v492
      %v560 = vunpack.c.l.b16 %v493
      %v561 = vunpack.c.h.b16 %v493
      %v562 = vunpack.c.l.b16 %v494
      %v563 = vunpack.c.h.b16 %v494
      %v564 = vunpack.c.l.b16 %v495
      %v565 = vunpack.c.h.b16 %v495
      %v566 = vunpack.c.l.b16 %v496
      %v567 = vunpack.c.h.b16 %v496
      %v568 = vunpack.c.l.b16 %v497
      %v569 = vunpack.c.h.b16 %v497
      %v570 = vunpack.c.l.b16 %v498
      %v571 = vunpack.c.h.b16 %v498
      %v572 = vunpack.c.l.b16 %v499
      %v573 = vunpack.c.h.b16 %v499
      %v574 = vunpack.c.l.b16 %v500
      %v575 = vunpack.c.h.b16 %v500
      %v576 = vunpack.c.l.b16 %v501
      %v577 = vunpack.c.h.b16 %v501
      %v578 = vunpack.c.l.b16 %v502
      %v579 = vunpack.c.h.b16 %v502
      %v580 = vunpack.c.l.b16 %v503
      %v581 = vunpack.c.h.b16 %v503
      %v582 = vunpack.c.l.b16 %v504
      %v583 = vunpack.c.h.b16 %v504
      %v584 = vunpack.c.l.b16 %v505
      %v585 = vunpack.c.h.b16 %v505
      %v586 = vunpack.c.l.b16 %v506
      %v587 = vunpack.c.h.b16 %v506
      %v588 = vunpack.c.l.b16 %v507
      %v589 = vunpack.c.h.b16 %v507
      %v590 = vunpack.c.l.b16 %v508
      %v591 = vunpack.c.h.b16 %v508
      %v592 = vunpack.c.l.b16 %v509
      %v593 = vunpack.c.h.b16 %v509
      %v594 = vunpack.c.l.b16 %v510
      %v595 = vunpack.c.h.b16 %v510
      %v596 = vunpack.c.l.b16 %v511
      %v597 = vunpack.c.h.b16 %v511
      %v598 = vunpack.c.l.b16 %v512
      %v599 = vunpack.c.h.b16 %v512
      %v600 = vunpack.c.l.b16 %v513
      %v601 = vunpack.c.h.b16 %v513
      %v602 = vunpack.c.l.b16 %v514
      %v603 = vunpack.c.h.b16 %v514
      %v604 = vunpack.c.l.b16 %v515
      %v605 = vunpack.c.h.b16 %v515
      %v606 = vunpack.c.l.b16 %v516
      %v607 = vunpack.c.h.b16 %v516
      %v608 = vunpack.c.l.b16 %v517
      %v609 = vunpack.c.h.b16 %v517
      %v610 = vunpack.c.l.b16 %v518
      %v611 = vunpack.c.h.b16 %v518
      %v612 = vunpack.c.l.b16 %v519
      %v613 = vunpack.c.h.b16 %v519
      %v614 = vunpack.c.l.b16 %v520
      %v615 = vunpack.c.h.b16 %v520
      %v616 = vunpack.c.l.b16 %v521
      %v617 = vunpack.c.h.b16 %v521
      %v618 = vpack.c.b16 %v556, %v554
      %v619 = vpack.c.b16 %v557, %v555
      %v620 = vpack.c.b16 %v560, %v558
      %v621 = vpack.c.b16 %v561, %v559
      %v622 = vpack.c.b16 %v564, %v562
      %v623 = vpack.c.b16 %v565, %v563
      %v624 = vpack.c.b16 %v568, %v566
      %v625 = vpack.c.b16 %v569, %v567
      %v626 = vpack.c.b16 %v572, %v570
      %v627 = vpack.c.b16 %v573, %v571
      %v628 = vpack.c.b16 %v576, %v574
      %v629 = vpack.c.b16 %v577, %v575
      %v630 = vpack.c.b16 %v580, %v578
      %v631 = vpack.c.b16 %v581, %v579
      %v632 = vpack.c.b16 %v584, %v582
      %v633 = vpack.c.b16 %v585, %v583
      %v634 = vpack.c.b16 %v588, %v586
      %v635 = vpack.c.b16 %v589, %v587
      %v636 = vpack.c.b16 %v592, %v590
      %v637 = vpack.c.b16 %v593, %v591
      %v638 = vpack.c.b16 %v596, %v594
      %v639 = vpack.c.b16 %v597, %v595
      %v640 = vpack.c.b16 %v600, %v598
      %v641 = vpack.c.b16 %v601, %v599
      %v642 = vpack.c.b16 %v604, %v602
      %v643 = vpack.c.b16 %v605, %v603
      %v644 = vpack.c.b16 %v608, %v606
      %v645 = vpack.c.b16 %v609, %v607
      %v646 = vpack.c.b16 %v612, %v610
      %v647 = vpack.c.b16 %v613, %v611
      %v648 = vpack.c.b16 %v616, %v614
      %v649 = vpack.c.b16 %v617, %v615
      %682 = vmatpush.bf16.msra.mxu0 %v632
      %683 = vmatpush.bf16.msra.mxu0 %v630
      %684 = vmatpush.bf16.msra.mxu0 %v628
      %685 = vmatpush.bf16.msra.mxu0 %v626
      %686 = vmatpush.bf16.msra.mxu0 %v624
      %687 = vmatpush.bf16.msra.mxu0 %v622
      %688 = vmatpush.bf16.msra.mxu0 %v620
      %689 = vmatpush.bf16.msra.mxu0 %v618
      %690 = vmatmul.bf16.gmra.mxu0 %v474
      %v691 = vpop.f32.mrf.mxu0
      %v692 = vadd.f32 0.0, %v691
      %v693 = vpop.f32.mrf.mxu0
      %v694 = vadd.f32 0.0, %v693
      %695 = vmatmul.bf16.gmra.mxu0 %v476
      %v696 = vpop.f32.mrf.mxu0
      %v697 = vadd.f32 0.0, %v696
      %v698 = vpop.f32.mrf.mxu0
      %v699 = vadd.f32 0.0, %v698
      %700 = vmatmul.bf16.gmra.mxu0 %v478
      %v701 = vpop.f32.mrf.mxu0
      %v702 = vadd.f32 0.0, %v701
      %v703 = vpop.f32.mrf.mxu0
      %v704 = vadd.f32 0.0, %v703
      %705 = vmatmul.bf16.gmra.mxu0 %v480
      %v706 = vpop.f32.mrf.mxu0
      %v707 = vadd.f32 0.0, %v706
      %v708 = vpop.f32.mrf.mxu0
      %v709 = vadd.f32 0.0, %v708
      %710 = vmatmul.bf16.gmra.mxu0 %v482
      %v711 = vpop.f32.mrf.mxu0
      %v712 = vadd.f32 0.0, %v711
      %v713 = vpop.f32.mrf.mxu0
      %v714 = vadd.f32 0.0, %v713
      %715 = vmatmul.bf16.gmra.mxu0 %v484
      %v716 = vpop.f32.mrf.mxu0
      %v717 = vadd.f32 0.0, %v716
      %v718 = vpop.f32.mrf.mxu0
      %v719 = vadd.f32 0.0, %v718
      %720 = vmatmul.bf16.gmra.mxu0 %v486
      %v721 = vpop.f32.mrf.mxu0
      %v722 = vadd.f32 0.0, %v721
      %v723 = vpop.f32.mrf.mxu0
      %v724 = vadd.f32 0.0, %v723
      %725 = vmatmul.bf16.gmra.mxu0 %v488
      %v726 = vpop.f32.mrf.mxu0
      %v727 = vadd.f32 0.0, %v726
      %v728 = vpop.f32.mrf.mxu0
      %v729 = vadd.f32 0.0, %v728
      %730 = vdwg.mxu0
      %731 = vmatpush.bf16.msra.mxu0 %v648
      %732 = vmatpush.bf16.msra.mxu0 %v646
      %733 = vmatpush.bf16.msra.mxu0 %v644
      %734 = vmatpush.bf16.msra.mxu0 %v642
      %735 = vmatpush.bf16.msra.mxu0 %v640
      %736 = vmatpush.bf16.msra.mxu0 %v638
      %737 = vmatpush.bf16.msra.mxu0 %v636
      %738 = vmatpush.bf16.msra.mxu0 %v634
      %739 = vmatmul.bf16.gmra.mxu0 %v475
      %v740 = vpop.f32.mrf.mxu0
      %v741 = vadd.f32 %v692, %v740
      %v742 = vpop.f32.mrf.mxu0
      %v743 = vadd.f32 %v694, %v742
      %744 = vmatmul.bf16.gmra.mxu0 %v477
      %v745 = vpop.f32.mrf.mxu0
      %v746 = vadd.f32 %v697, %v745
      %v747 = vpop.f32.mrf.mxu0
      %v748 = vadd.f32 %v699, %v747
      %749 = vmatmul.bf16.gmra.mxu0 %v479
      %v750 = vpop.f32.mrf.mxu0
      %v751 = vadd.f32 %v702, %v750
      %v752 = vpop.f32.mrf.mxu0
      %v753 = vadd.f32 %v704, %v752
      %754 = vmatmul.bf16.gmra.mxu0 %v481
      %v755 = vpop.f32.mrf.mxu0
      %v756 = vadd.f32 %v707, %v755
      %v757 = vpop.f32.mrf.mxu0
      %v758 = vadd.f32 %v709, %v757
      %759 = vmatmul.bf16.gmra.mxu0 %v483
      %v760 = vpop.f32.mrf.mxu0
      %v761 = vadd.f32 %v712, %v760
      %v762 = vpop.f32.mrf.mxu0
      %v763 = vadd.f32 %v714, %v762
      %764 = vmatmul.bf16.gmra.mxu0 %v485
      %v765 = vpop.f32.mrf.mxu0
      %v766 = vadd.f32 %v717, %v765
      %v767 = vpop.f32.mrf.mxu0
      %v768 = vadd.f32 %v719, %v767
      %769 = vmatmul.bf16.gmra.mxu0 %v487
      %v770 = vpop.f32.mrf.mxu0
      %v771 = vadd.f32 %v722, %v770
      %v772 = vpop.f32.mrf.mxu0
      %v773 = vadd.f32 %v724, %v772
      %774 = vmatmul.bf16.gmra.mxu0 %v489
      %v775 = vpop.f32.mrf.mxu0
      %v776 = vadd.f32 %v727, %v775
      %v777 = vpop.f32.mrf.mxu0
      %v778 = vadd.f32 %v729, %v777
      %779 = vdwg.mxu0
      %780 = vmatpush.bf16.msra.mxu0 %v633
      %781 = vmatpush.bf16.msra.mxu0 %v631
      %782 = vmatpush.bf16.msra.mxu0 %v629
      %783 = vmatpush.bf16.msra.mxu0 %v627
      %784 = vmatpush.bf16.msra.mxu0 %v625
      %785 = vmatpush.bf16.msra.mxu0 %v623
      %786 = vmatpush.bf16.msra.mxu0 %v621
      %787 = vmatpush.bf16.msra.mxu0 %v619
      %788 = vmatmul.bf16.gmra.mxu0 %v474
      %v789 = vpop.f32.mrf.mxu0
      %v790 = vadd.f32 0.0, %v789
      %v791 = vpop.f32.mrf.mxu0
      %v792 = vadd.f32 0.0, %v791
      %793 = vmatmul.bf16.gmra.mxu0 %v476
      %v794 = vpop.f32.mrf.mxu0
      %v795 = vadd.f32 0.0, %v794
      %v796 = vpop.f32.mrf.mxu0
      %v797 = vadd.f32 0.0, %v796
      %798 = vmatmul.bf16.gmra.mxu0 %v478
      %v799 = vpop.f32.mrf.mxu0
      %v800 = vadd.f32 0.0, %v799
      %v801 = vpop.f32.mrf.mxu0
      %v802 = vadd.f32 0.0, %v801
      %803 = vmatmul.bf16.gmra.mxu0 %v480
      %v804 = vpop.f32.mrf.mxu0
      %v805 = vadd.f32 0.0, %v804
      %v806 = vpop.f32.mrf.mxu0
      %v807 = vadd.f32 0.0, %v806
      %808 = vmatmul.bf16.gmra.mxu0 %v482
      %v809 = vpop.f32.mrf.mxu0
      %v810 = vadd.f32 0.0, %v809
      %v811 = vpop.f32.mrf.mxu0
      %v812 = vadd.f32 0.0, %v811
      %813 = vmatmul.bf16.gmra.mxu0 %v484
      %v814 = vpop.f32.mrf.mxu0
      %v815 = vadd.f32 0.0, %v814
      %v816 = vpop.f32.mrf.mxu0
      %v817 = vadd.f32 0.0, %v816
      %818 = vmatmul.bf16.gmra.mxu0 %v486
      %v819 = vpop.f32.mrf.mxu0
      %v820 = vadd.f32 0.0, %v819
      %v821 = vpop.f32.mrf.mxu0
      %v822 = vadd.f32 0.0, %v821
      %823 = vmatmul.bf16.gmra.mxu0 %v488
      %v824 = vpop.f32.mrf.mxu0
      %v825 = vadd.f32 0.0, %v824
      %v826 = vpop.f32.mrf.mxu0
      %v827 = vadd.f32 0.0, %v826
      %828 = vdwg.mxu0
      %829 = vmatpush.bf16.msra.mxu0 %v649
      %830 = vmatpush.bf16.msra.mxu0 %v647
      %831 = vmatpush.bf16.msra.mxu0 %v645
      %832 = vmatpush.bf16.msra.mxu0 %v643
      %833 = vmatpush.bf16.msra.mxu0 %v641
      %834 = vmatpush.bf16.msra.mxu0 %v639
      %835 = vmatpush.bf16.msra.mxu0 %v637
      %836 = vmatpush.bf16.msra.mxu0 %v635
      %837 = vmatmul.bf16.gmra.mxu0 %v475
      %v838 = vpop.f32.mrf.mxu0
      %v839 = vadd.f32 %v790, %v838
      %v840 = vpop.f32.mrf.mxu0
      %v841 = vadd.f32 %v792, %v840
      %842 = vmatmul.bf16.gmra.mxu0 %v477
      %v843 = vpop.f32.mrf.mxu0
      %v844 = vadd.f32 %v795, %v843
      %v845 = vpop.f32.mrf.mxu0
      %v846 = vadd.f32 %v797, %v845
      %847 = vmatmul.bf16.gmra.mxu0 %v479
      %v848 = vpop.f32.mrf.mxu0
      %v849 = vadd.f32 %v800, %v848
      %v850 = vpop.f32.mrf.mxu0
      %v851 = vadd.f32 %v802, %v850
      %852 = vmatmul.bf16.gmra.mxu0 %v481
      %v853 = vpop.f32.mrf.mxu0
      %v854 = vadd.f32 %v805, %v853
      %v855 = vpop.f32.mrf.mxu0
      %v856 = vadd.f32 %v807, %v855
      %857 = vmatmul.bf16.gmra.mxu0 %v483
      %v858 = vpop.f32.mrf.mxu0
      %v859 = vadd.f32 %v810, %v858
      %v860 = vpop.f32.mrf.mxu0
      %v861 = vadd.f32 %v812, %v860
      %862 = vmatmul.bf16.gmra.mxu0 %v485
      %v863 = vpop.f32.mrf.mxu0
      %v864 = vadd.f32 %v815, %v863
      %v865 = vpop.f32.mrf.mxu0
      %v866 = vadd.f32 %v817, %v865
      %867 = vmatmul.bf16.gmra.mxu0 %v487
      %v868 = vpop.f32.mrf.mxu0
      %v869 = vadd.f32 %v820, %v868
      %v870 = vpop.f32.mrf.mxu0
      %v871 = vadd.f32 %v822, %v870
      %872 = vmatmul.bf16.gmra.mxu0 %v489
      %v873 = vpop.f32.mrf.mxu0
      %v874 = vadd.f32 %v825, %v873
      %v875 = vpop.f32.mrf.mxu0
      %v876 = vadd.f32 %v827, %v875
      %877 = vdwg.mxu0
      %v878 = vld [vmem:[%s5] sm:$0xf]
      %v879 = vld [vmem:[%s5 + $0x4] sm:$0xf]
      %v880 = vld [vmem:[%s5 + $0x8] sm:$0xf]
      %v881 = vld [vmem:[%s5 + $0xc] sm:$0xf]
      %v882 = vld [vmem:[%s5 + $0x10] sm:$0xf]
      %v883 = vld [vmem:[%s5 + $0x14] sm:$0xf]
      %v884 = vld [vmem:[%s5 + $0x18] sm:$0xf]
      %v885 = vld [vmem:[%s5 + $0x1c] sm:$0xf]
      %v886 = vpack.c.bf16 %v743, %v741
      %v887 = vpack.c.bf16 %v753, %v751
      %v888 = vpack.c.bf16 %v763, %v761
      %v889 = vpack.c.bf16 %v773, %v771
      %v890 = vpack.c.bf16 %v748, %v746
      %v891 = vpack.c.bf16 %v758, %v756
      %v892 = vpack.c.bf16 %v768, %v766
      %v893 = vpack.c.bf16 %v778, %v776
      %v894 = vpack.c.bf16 %v841, %v839
      %v895 = vpack.c.bf16 %v851, %v849
      %v896 = vpack.c.bf16 %v861, %v859
      %v897 = vpack.c.bf16 %v871, %v869
      %v898 = vpack.c.bf16 %v846, %v844
      %v899 = vpack.c.bf16 %v856, %v854
      %v900 = vpack.c.bf16 %v866, %v864
      %v901 = vpack.c.bf16 %v876, %v874
      %v910 = vunpack.c.l.b16 %v878
      %v911 = vunpack.c.l.b16 %v879
      %v912 = vunpack.c.l.b16 %v880
      %v913 = vunpack.c.l.b16 %v881
      %v914 = vunpack.c.l.b16 %v882
      %v915 = vunpack.c.l.b16 %v883
      %v916 = vunpack.c.l.b16 %v884
      %v917 = vunpack.c.l.b16 %v885
      %v918 = vpack.c.b16 %v911, %v910
      %v919 = vpack.c.b16 %v913, %v912
      %v920 = vpack.c.b16 %v915, %v914
      %v921 = vpack.c.b16 %v917, %v916
      %vm922 = vcmask 523264
      %v924 = vsel %vm922, %v918, 0
      %v927 = vsel %vm922, %v919, 0
      %v930 = vsel %vm922, %v920, 0
      %v933 = vsel %vm922, %v921, 0
      %935 = vmatpush.bf16.msra.mxu0 0
      %936 = vmatpush.bf16.msra.mxu0 0
      %937 = vmatpush.bf16.msra.mxu0 0
      %938 = vmatpush.bf16.msra.mxu0 0
      %939 = vmatpush.bf16.msra.mxu0 %v898
      %940 = vmatpush.bf16.msra.mxu0 %v894
      %941 = vmatpush.bf16.msra.mxu0 %v890
      %942 = vmatpush.bf16.msra.mxu0 %v886
      %943 = vmatmul.bf16.gmra.mxu0 %v924
      %v944 = vpop.f32.mrf.mxu0
      %v945 = vadd.f32 0.0, %v944
      %v946 = vpop.f32.mrf.mxu0
      %v947 = vadd.f32 0.0, %v946
      %948 = vmatmul.bf16.gmra.mxu0 %v927
      %v949 = vpop.f32.mrf.mxu0
      %v950 = vadd.f32 0.0, %v949
      %v951 = vpop.f32.mrf.mxu0
      %v952 = vadd.f32 0.0, %v951
      %953 = vmatmul.bf16.gmra.mxu0 %v930
      %v954 = vpop.f32.mrf.mxu0
      %v955 = vadd.f32 0.0, %v954
      %v956 = vpop.f32.mrf.mxu0
      %v957 = vadd.f32 0.0, %v956
      %958 = vmatmul.bf16.gmra.mxu0 %v933
      %v959 = vpop.f32.mrf.mxu0
      %v960 = vadd.f32 0.0, %v959
      %v961 = vpop.f32.mrf.mxu0
      %v962 = vadd.f32 0.0, %v961
      %963 = vdwg.mxu0
      %964 = vmatpush.bf16.msra.mxu0 0
      %965 = vmatpush.bf16.msra.mxu0 0
      %966 = vmatpush.bf16.msra.mxu0 0
      %967 = vmatpush.bf16.msra.mxu0 0
      %968 = vmatpush.bf16.msra.mxu0 %v899
      %969 = vmatpush.bf16.msra.mxu0 %v895
      %970 = vmatpush.bf16.msra.mxu0 %v891
      %971 = vmatpush.bf16.msra.mxu0 %v887
      %972 = vmatmul.bf16.gmra.mxu0 %v924
      %v973 = vpop.f32.mrf.mxu0
      %v974 = vadd.f32 0.0, %v973
      %v975 = vpop.f32.mrf.mxu0
      %v976 = vadd.f32 0.0, %v975
      %977 = vmatmul.bf16.gmra.mxu0 %v927
      %v978 = vpop.f32.mrf.mxu0
      %v979 = vadd.f32 0.0, %v978
      %v980 = vpop.f32.mrf.mxu0
      %v981 = vadd.f32 0.0, %v980
      %982 = vmatmul.bf16.gmra.mxu0 %v930
      %v983 = vpop.f32.mrf.mxu0
      %v984 = vadd.f32 0.0, %v983
      %v985 = vpop.f32.mrf.mxu0
      %v986 = vadd.f32 0.0, %v985
      %987 = vmatmul.bf16.gmra.mxu0 %v933
      %v988 = vpop.f32.mrf.mxu0
      %v989 = vadd.f32 0.0, %v988
      %v990 = vpop.f32.mrf.mxu0
      %v991 = vadd.f32 0.0, %v990
      %992 = vdwg.mxu0
      %993 = vmatpush.bf16.msra.mxu0 0
      %994 = vmatpush.bf16.msra.mxu0 0
      %995 = vmatpush.bf16.msra.mxu0 0
      %996 = vmatpush.bf16.msra.mxu0 0
      %997 = vmatpush.bf16.msra.mxu0 %v900
      %998 = vmatpush.bf16.msra.mxu0 %v896
      %999 = vmatpush.bf16.msra.mxu0 %v892
      %1000 = vmatpush.bf16.msra.mxu0 %v888
      %1001 = vmatmul.bf16.gmra.mxu0 %v924
      %v1002 = vpop.f32.mrf.mxu0
      %v1003 = vadd.f32 0.0, %v1002
      %v1004 = vpop.f32.mrf.mxu0
      %v1005 = vadd.f32 0.0, %v1004
      %1006 = vmatmul.bf16.gmra.mxu0 %v927
      %v1007 = vpop.f32.mrf.mxu0
      %v1008 = vadd.f32 0.0, %v1007
      %v1009 = vpop.f32.mrf.mxu0
      %v1010 = vadd.f32 0.0, %v1009
      %1011 = vmatmul.bf16.gmra.mxu0 %v930
      %v1012 = vpop.f32.mrf.mxu0
      %v1013 = vadd.f32 0.0, %v1012
      %v1014 = vpop.f32.mrf.mxu0
      %v1015 = vadd.f32 0.0, %v1014
      %1016 = vmatmul.bf16.gmra.mxu0 %v933
      %v1017 = vpop.f32.mrf.mxu0
      %v1018 = vadd.f32 0.0, %v1017
      %v1019 = vpop.f32.mrf.mxu0
      %v1020 = vadd.f32 0.0, %v1019
      %1021 = vdwg.mxu0
      %1022 = vmatpush.bf16.msra.mxu0 0
      %1023 = vmatpush.bf16.msra.mxu0 0
      %1024 = vmatpush.bf16.msra.mxu0 0
      %1025 = vmatpush.bf16.msra.mxu0 0
      %1026 = vmatpush.bf16.msra.mxu0 %v901
      %1027 = vmatpush.bf16.msra.mxu0 %v897
      %1028 = vmatpush.bf16.msra.mxu0 %v893
      %1029 = vmatpush.bf16.msra.mxu0 %v889
      %1030 = vmatmul.bf16.gmra.mxu0 %v924
      %v1031 = vpop.f32.mrf.mxu0
      %v1032 = vadd.f32 0.0, %v1031
      %v1033 = vpop.f32.mrf.mxu0
      %v1034 = vadd.f32 0.0, %v1033
      %1035 = vmatmul.bf16.gmra.mxu0 %v927
      %v1036 = vpop.f32.mrf.mxu0
      %v1037 = vadd.f32 0.0, %v1036
      %v1038 = vpop.f32.mrf.mxu0
      %v1039 = vadd.f32 0.0, %v1038
      %1040 = vmatmul.bf16.gmra.mxu0 %v930
      %v1041 = vpop.f32.mrf.mxu0
      %v1042 = vadd.f32 0.0, %v1041
      %v1043 = vpop.f32.mrf.mxu0
      %v1044 = vadd.f32 0.0, %v1043
      %1045 = vmatmul.bf16.gmra.mxu0 %v933
      %v1046 = vpop.f32.mrf.mxu0
      %v1047 = vadd.f32 0.0, %v1046
      %v1048 = vpop.f32.mrf.mxu0
      %v1049 = vadd.f32 0.0, %v1048
      %1050 = vdwg.mxu0
      %v1051 = vmul.f32 %v945, %v945
      %v1052 = vmul.f32 %v974, %v974
      %v1053 = vmul.f32 %v1003, %v1003
      %v1054 = vmul.f32 %v1032, %v1032
      %v1055 = vmul.f32 %v947, %v947
      %v1056 = vmul.f32 %v976, %v976
      %v1057 = vmul.f32 %v1005, %v1005
      %v1058 = vmul.f32 %v1034, %v1034
      %v1059 = vmul.f32 %v950, %v950
      %v1060 = vmul.f32 %v979, %v979
      %v1061 = vmul.f32 %v1008, %v1008
      %v1062 = vmul.f32 %v1037, %v1037
      %v1063 = vmul.f32 %v952, %v952
      %v1064 = vmul.f32 %v981, %v981
      %v1065 = vmul.f32 %v1010, %v1010
      %v1066 = vmul.f32 %v1039, %v1039
      %v1067 = vmul.f32 %v955, %v955
      %v1068 = vmul.f32 %v984, %v984
      %v1069 = vmul.f32 %v1013, %v1013
      %v1070 = vmul.f32 %v1042, %v1042
      %v1071 = vmul.f32 %v957, %v957
      %v1072 = vmul.f32 %v986, %v986
      %v1073 = vmul.f32 %v1015, %v1015
      %v1074 = vmul.f32 %v1044, %v1044
      %v1075 = vmul.f32 %v960, %v960
      %v1076 = vmul.f32 %v989, %v989
      %v1077 = vmul.f32 %v1018, %v1018
      %v1078 = vmul.f32 %v1047, %v1047
      %v1079 = vmul.f32 %v962, %v962
      %v1080 = vmul.f32 %v991, %v991
      %v1081 = vmul.f32 %v1020, %v1020
      %v1082 = vmul.f32 %v1049, %v1049
      %v1083 = vadd.f32 %v1051, %v1067
      %v1084 = vadd.f32 %v1052, %v1068
      %v1085 = vadd.f32 %v1053, %v1069
      %v1086 = vadd.f32 %v1054, %v1070
      %v1087 = vadd.f32 %v1055, %v1071
      %v1088 = vadd.f32 %v1056, %v1072
      %v1089 = vadd.f32 %v1057, %v1073
      %v1090 = vadd.f32 %v1058, %v1074
      %v1091 = vadd.f32 %v1059, %v1075
      %v1092 = vadd.f32 %v1060, %v1076
      %v1093 = vadd.f32 %v1061, %v1077
      %v1094 = vadd.f32 %v1062, %v1078
      %v1095 = vadd.f32 %v1063, %v1079
      %v1096 = vadd.f32 %v1064, %v1080
      %v1097 = vadd.f32 %v1065, %v1081
      %v1098 = vadd.f32 %v1066, %v1082
      %v1099 = vrsqrt.pop %v1083
      %v1100 = vmul.f32 %v1099, %v1083
      %v1101 = vmul.f32 %v1100, %v1099
      %v1102 = vmul.f32 0.5, %v1101
      %v1103 = vsub.f32 1.5, %v1102
      %v1104 = vmul.f32 %v1099, %v1103
      %v1105 = vmul.f32 %v1083, %v1104
      %vm1106 = vcmp.eq.f32.partialorder %v1083, inf
      %v1107 = vsel %vm1106, %v1083, %v1105
      %vm1108 = vcmp.eq.f32.partialorder %v1083, 0.0
      %v1109 = vand.u32 %v1083, 2147483648
      %v1110 = vsel %vm1108, %v1109, %v1107
      %v1111 = vrsqrt.pop %v1084
      %v1112 = vmul.f32 %v1111, %v1084
      %v1113 = vmul.f32 %v1112, %v1111
      %v1114 = vmul.f32 0.5, %v1113
      %v1115 = vsub.f32 1.5, %v1114
      %v1116 = vmul.f32 %v1111, %v1115
      %v1117 = vmul.f32 %v1084, %v1116
      %vm1118 = vcmp.eq.f32.partialorder %v1084, inf
      %v1119 = vsel %vm1118, %v1084, %v1117
      %vm1120 = vcmp.eq.f32.partialorder %v1084, 0.0
      %v1121 = vand.u32 %v1084, 2147483648
      %v1122 = vsel %vm1120, %v1121, %v1119
      %v1123 = vrsqrt.pop %v1085
      %v1124 = vmul.f32 %v1123, %v1085
      %v1125 = vmul.f32 %v1124, %v1123
      %v1126 = vmul.f32 0.5, %v1125
      %v1127 = vsub.f32 1.5, %v1126
      %v1128 = vmul.f32 %v1123, %v1127
      %v1129 = vmul.f32 %v1085, %v1128
      %vm1130 = vcmp.eq.f32.partialorder %v1085, inf
      %v1131 = vsel %vm1130, %v1085, %v1129
      %vm1132 = vcmp.eq.f32.partialorder %v1085, 0.0
      %v1133 = vand.u32 %v1085, 2147483648
      %v1134 = vsel %vm1132, %v1133, %v1131
      %v1135 = vrsqrt.pop %v1086
      %v1136 = vmul.f32 %v1135, %v1086
      %v1137 = vmul.f32 %v1136, %v1135
      %v1138 = vmul.f32 0.5, %v1137
      %v1139 = vsub.f32 1.5, %v1138
      %v1140 = vmul.f32 %v1135, %v1139
      %v1141 = vmul.f32 %v1086, %v1140
      %vm1142 = vcmp.eq.f32.partialorder %v1086, inf
      %v1143 = vsel %vm1142, %v1086, %v1141
      %vm1144 = vcmp.eq.f32.partialorder %v1086, 0.0
      %v1145 = vand.u32 %v1086, 2147483648
      %v1146 = vsel %vm1144, %v1145, %v1143
      %v1147 = vrsqrt.pop %v1087
      %v1148 = vmul.f32 %v1147, %v1087
      %v1149 = vmul.f32 %v1148, %v1147
      %v1150 = vmul.f32 0.5, %v1149
      %v1151 = vsub.f32 1.5, %v1150
      %v1152 = vmul.f32 %v1147, %v1151
      %v1153 = vmul.f32 %v1087, %v1152
      %vm1154 = vcmp.eq.f32.partialorder %v1087, inf
      %v1155 = vsel %vm1154, %v1087, %v1153
      %vm1156 = vcmp.eq.f32.partialorder %v1087, 0.0
      %v1157 = vand.u32 %v1087, 2147483648
      %v1158 = vsel %vm1156, %v1157, %v1155
      %v1159 = vrsqrt.pop %v1088
      %v1160 = vmul.f32 %v1159, %v1088
      %v1161 = vmul.f32 %v1160, %v1159
      %v1162 = vmul.f32 0.5, %v1161
      %v1163 = vsub.f32 1.5, %v1162
      %v1164 = vmul.f32 %v1159, %v1163
      %v1165 = vmul.f32 %v1088, %v1164
      %vm1166 = vcmp.eq.f32.partialorder %v1088, inf
      %v1167 = vsel %vm1166, %v1088, %v1165
      %vm1168 = vcmp.eq.f32.partialorder %v1088, 0.0
      %v1169 = vand.u32 %v1088, 2147483648
      %v1170 = vsel %vm1168, %v1169, %v1167
      %v1171 = vrsqrt.pop %v1089
      %v1172 = vmul.f32 %v1171, %v1089
      %v1173 = vmul.f32 %v1172, %v1171
      %v1174 = vmul.f32 0.5, %v1173
      %v1175 = vsub.f32 1.5, %v1174
      %v1176 = vmul.f32 %v1171, %v1175
      %v1177 = vmul.f32 %v1089, %v1176
      %vm1178 = vcmp.eq.f32.partialorder %v1089, inf
      %v1179 = vsel %vm1178, %v1089, %v1177
      %vm1180 = vcmp.eq.f32.partialorder %v1089, 0.0
      %v1181 = vand.u32 %v1089, 2147483648
      %v1182 = vsel %vm1180, %v1181, %v1179
      %v1183 = vrsqrt.pop %v1090
      %v1184 = vmul.f32 %v1183, %v1090
      %v1185 = vmul.f32 %v1184, %v1183
      %v1186 = vmul.f32 0.5, %v1185
      %v1187 = vsub.f32 1.5, %v1186
      %v1188 = vmul.f32 %v1183, %v1187
      %v1189 = vmul.f32 %v1090, %v1188
      %vm1190 = vcmp.eq.f32.partialorder %v1090, inf
      %v1191 = vsel %vm1190, %v1090, %v1189
      %vm1192 = vcmp.eq.f32.partialorder %v1090, 0.0
      %v1193 = vand.u32 %v1090, 2147483648
      %v1194 = vsel %vm1192, %v1193, %v1191
      %v1195 = vrsqrt.pop %v1091
      %v1196 = vmul.f32 %v1195, %v1091
      %v1197 = vmul.f32 %v1196, %v1195
      %v1198 = vmul.f32 0.5, %v1197
      %v1199 = vsub.f32 1.5, %v1198
      %v1200 = vmul.f32 %v1195, %v1199
      %v1201 = vmul.f32 %v1091, %v1200
      %vm1202 = vcmp.eq.f32.partialorder %v1091, inf
      %v1203 = vsel %vm1202, %v1091, %v1201
      %vm1204 = vcmp.eq.f32.partialorder %v1091, 0.0
      %v1205 = vand.u32 %v1091, 2147483648
      %v1206 = vsel %vm1204, %v1205, %v1203
      %v1207 = vrsqrt.pop %v1092
      %v1208 = vmul.f32 %v1207, %v1092
      %v1209 = vmul.f32 %v1208, %v1207
      %v1210 = vmul.f32 0.5, %v1209
      %v1211 = vsub.f32 1.5, %v1210
      %v1212 = vmul.f32 %v1207, %v1211
      %v1213 = vmul.f32 %v1092, %v1212
      %vm1214 = vcmp.eq.f32.partialorder %v1092, inf
      %v1215 = vsel %vm1214, %v1092, %v1213
      %vm1216 = vcmp.eq.f32.partialorder %v1092, 0.0
      %v1217 = vand.u32 %v1092, 2147483648
      %v1218 = vsel %vm1216, %v1217, %v1215
      %v1219 = vrsqrt.pop %v1093
      %v1220 = vmul.f32 %v1219, %v1093
      %v1221 = vmul.f32 %v1220, %v1219
      %v1222 = vmul.f32 0.5, %v1221
      %v1223 = vsub.f32 1.5, %v1222
      %v1224 = vmul.f32 %v1219, %v1223
      %v1225 = vmul.f32 %v1093, %v1224
      %vm1226 = vcmp.eq.f32.partialorder %v1093, inf
      %v1227 = vsel %vm1226, %v1093, %v1225
      %vm1228 = vcmp.eq.f32.partialorder %v1093, 0.0
      %v1229 = vand.u32 %v1093, 2147483648
      %v1230 = vsel %vm1228, %v1229, %v1227
      %v1231 = vrsqrt.pop %v1094
      %v1232 = vmul.f32 %v1231, %v1094
      %v1233 = vmul.f32 %v1232, %v1231
      %v1234 = vmul.f32 0.5, %v1233
      %v1235 = vsub.f32 1.5, %v1234
      %v1236 = vmul.f32 %v1231, %v1235
      %v1237 = vmul.f32 %v1094, %v1236
      %vm1238 = vcmp.eq.f32.partialorder %v1094, inf
      %v1239 = vsel %vm1238, %v1094, %v1237
      %vm1240 = vcmp.eq.f32.partialorder %v1094, 0.0
      %v1241 = vand.u32 %v1094, 2147483648
      %v1242 = vsel %vm1240, %v1241, %v1239
      %v1243 = vrsqrt.pop %v1095
      %v1244 = vmul.f32 %v1243, %v1095
      %v1245 = vmul.f32 %v1244, %v1243
      %v1246 = vmul.f32 0.5, %v1245
      %v1247 = vsub.f32 1.5, %v1246
      %v1248 = vmul.f32 %v1243, %v1247
      %v1249 = vmul.f32 %v1095, %v1248
      %vm1250 = vcmp.eq.f32.partialorder %v1095, inf
      %v1251 = vsel %vm1250, %v1095, %v1249
      %vm1252 = vcmp.eq.f32.partialorder %v1095, 0.0
      %v1253 = vand.u32 %v1095, 2147483648
      %v1254 = vsel %vm1252, %v1253, %v1251
      %v1255 = vrsqrt.pop %v1096
      %v1256 = vmul.f32 %v1255, %v1096
      %v1257 = vmul.f32 %v1256, %v1255
      %v1258 = vmul.f32 0.5, %v1257
      %v1259 = vsub.f32 1.5, %v1258
      %v1260 = vmul.f32 %v1255, %v1259
      %v1261 = vmul.f32 %v1096, %v1260
      %vm1262 = vcmp.eq.f32.partialorder %v1096, inf
      %v1263 = vsel %vm1262, %v1096, %v1261
      %vm1264 = vcmp.eq.f32.partialorder %v1096, 0.0
      %v1265 = vand.u32 %v1096, 2147483648
      %v1266 = vsel %vm1264, %v1265, %v1263
      %v1267 = vrsqrt.pop %v1097
      %v1268 = vmul.f32 %v1267, %v1097
      %v1269 = vmul.f32 %v1268, %v1267
      %v1270 = vmul.f32 0.5, %v1269
      %v1271 = vsub.f32 1.5, %v1270
      %v1272 = vmul.f32 %v1267, %v1271
      %v1273 = vmul.f32 %v1097, %v1272
      %vm1274 = vcmp.eq.f32.partialorder %v1097, inf
      %v1275 = vsel %vm1274, %v1097, %v1273
      %vm1276 = vcmp.eq.f32.partialorder %v1097, 0.0
      %v1277 = vand.u32 %v1097, 2147483648
      %v1278 = vsel %vm1276, %v1277, %v1275
      %v1279 = vrsqrt.pop %v1098
      %v1280 = vmul.f32 %v1279, %v1098
      %v1281 = vmul.f32 %v1280, %v1279
      %v1282 = vmul.f32 0.5, %v1281
      %v1283 = vsub.f32 1.5, %v1282
      %v1284 = vmul.f32 %v1279, %v1283
      %v1285 = vmul.f32 %v1098, %v1284
      %vm1286 = vcmp.eq.f32.partialorder %v1098, inf
      %v1287 = vsel %vm1286, %v1098, %v1285
      %vm1288 = vcmp.eq.f32.partialorder %v1098, 0.0
      %v1289 = vand.u32 %v1098, 2147483648
      %v1290 = vsel %vm1288, %v1289, %v1287
      %v1291 = vand.u32 2147483647, %v945
      %v1292 = vand.u32 2147483647, %v974
      %v1293 = vand.u32 2147483647, %v1003
      %v1294 = vand.u32 2147483647, %v1032
      %v1295 = vand.u32 2147483647, %v947
      %v1296 = vand.u32 2147483647, %v976
      %v1297 = vand.u32 2147483647, %v1005
      %v1298 = vand.u32 2147483647, %v1034
      %v1299 = vand.u32 2147483647, %v950
      %v1300 = vand.u32 2147483647, %v979
      %v1301 = vand.u32 2147483647, %v1008
      %v1302 = vand.u32 2147483647, %v1037
      %v1303 = vand.u32 2147483647, %v952
      %v1304 = vand.u32 2147483647, %v981
      %v1305 = vand.u32 2147483647, %v1010
      %v1306 = vand.u32 2147483647, %v1039
      %v1307 = vand.u32 2147483647, %v955
      %v1308 = vand.u32 2147483647, %v984
      %v1309 = vand.u32 2147483647, %v1013
      %v1310 = vand.u32 2147483647, %v1042
      %v1311 = vand.u32 2147483647, %v957
      %v1312 = vand.u32 2147483647, %v986
      %v1313 = vand.u32 2147483647, %v1015
      %v1314 = vand.u32 2147483647, %v1044
      %v1315 = vand.u32 2147483647, %v960
      %v1316 = vand.u32 2147483647, %v989
      %v1317 = vand.u32 2147483647, %v1018
      %v1318 = vand.u32 2147483647, %v1047
      %v1319 = vand.u32 2147483647, %v962
      %v1320 = vand.u32 2147483647, %v991
      %v1321 = vand.u32 2147483647, %v1020
      %v1322 = vand.u32 2147483647, %v1049
      %v1323 = vmax.f32 %v1291, %v1307
      %v1324 = vmax.f32 %v1292, %v1308
      %v1325 = vmax.f32 %v1293, %v1309
      %v1326 = vmax.f32 %v1294, %v1310
      %v1327 = vmax.f32 %v1295, %v1311
      %v1328 = vmax.f32 %v1296, %v1312
      %v1329 = vmax.f32 %v1297, %v1313
      %v1330 = vmax.f32 %v1298, %v1314
      %v1331 = vmax.f32 %v1299, %v1315
      %v1332 = vmax.f32 %v1300, %v1316
      %v1333 = vmax.f32 %v1301, %v1317
      %v1334 = vmax.f32 %v1302, %v1318
      %v1335 = vmax.f32 %v1303, %v1319
      %v1336 = vmax.f32 %v1304, %v1320
      %v1337 = vmax.f32 %v1305, %v1321
      %v1338 = vmax.f32 %v1306, %v1322
      %v1339 = vmin.f32 %v1291, %v1307
      %v1340 = vmin.f32 %v1292, %v1308
      %v1341 = vmin.f32 %v1293, %v1309
      %v1342 = vmin.f32 %v1294, %v1310
      %v1343 = vmin.f32 %v1295, %v1311
      %v1344 = vmin.f32 %v1296, %v1312
      %v1345 = vmin.f32 %v1297, %v1313
      %v1346 = vmin.f32 %v1298, %v1314
      %v1347 = vmin.f32 %v1299, %v1315
      %v1348 = vmin.f32 %v1300, %v1316
      %v1349 = vmin.f32 %v1301, %v1317
      %v1350 = vmin.f32 %v1302, %v1318
      %v1351 = vmin.f32 %v1303, %v1319
      %v1352 = vmin.f32 %v1304, %v1320
      %v1353 = vmin.f32 %v1305, %v1321
      %v1354 = vmin.f32 %v1306, %v1322
      %v1355 = vmax.f32 %v1323, 1e-30
      %v1356 = vmax.f32 %v1324, 1e-30
      %v1357 = vmax.f32 %v1325, 1e-30
      %v1358 = vmax.f32 %v1326, 1e-30
      %v1359 = vmax.f32 %v1327, 1e-30
      %v1360 = vmax.f32 %v1328, 1e-30
      %v1361 = vmax.f32 %v1329, 1e-30
      %v1362 = vmax.f32 %v1330, 1e-30
      %v1363 = vmax.f32 %v1331, 1e-30
      %v1364 = vmax.f32 %v1332, 1e-30
      %v1365 = vmax.f32 %v1333, 1e-30
      %v1366 = vmax.f32 %v1334, 1e-30
      %v1367 = vmax.f32 %v1335, 1e-30
      %v1368 = vmax.f32 %v1336, 1e-30
      %v1369 = vmax.f32 %v1337, 1e-30
      %v1370 = vmax.f32 %v1338, 1e-30
      %v1371 = vrcp.pop %v1355
      %v1372 = vmul.f32 %v1355, %v1371
      %v1373 = vsub.f32 1.0, %v1372
      %v1374 = vmul.f32 %v1371, %v1373
      %v1375 = vadd.f32 %v1371, %v1374
      %vm1376 = vweird.f32 %v1355
      %vm1377 = vweird.f32 %v1371
      %vm1378 = vmor %vm1376, %vm1377
      %v1379 = vsel %vm1378, %v1371, %v1375
      %v1380 = vand.u32 2147483647, %v1355
      %vm1381 = vcmp.eq.f32.partialorder %v1380, 8.507059e+37
      %v1382 = vand.u32 %v1355, 2147483648
      %v1383 = vor.u32 1.1754944e-38, %v1382
      %v1384 = vsel %vm1381, %v1383, %v1379
      %v1385 = vmul.f32 %v1339, %v1384
      %v1386 = vrcp.pop %v1356
      %v1387 = vmul.f32 %v1356, %v1386
      %v1388 = vsub.f32 1.0, %v1387
      %v1389 = vmul.f32 %v1386, %v1388
      %v1390 = vadd.f32 %v1386, %v1389
      %vm1391 = vweird.f32 %v1356
      %vm1392 = vweird.f32 %v1386
      %vm1393 = vmor %vm1391, %vm1392
      %v1394 = vsel %vm1393, %v1386, %v1390
      %v1395 = vand.u32 2147483647, %v1356
      %vm1396 = vcmp.eq.f32.partialorder %v1395, 8.507059e+37
      %v1397 = vand.u32 %v1356, 2147483648
      %v1398 = vor.u32 1.1754944e-38, %v1397
      %v1399 = vsel %vm1396, %v1398, %v1394
      %v1400 = vmul.f32 %v1340, %v1399
      %v1401 = vrcp.pop %v1357
      %v1402 = vmul.f32 %v1357, %v1401
      %v1403 = vsub.f32 1.0, %v1402
      %v1404 = vmul.f32 %v1401, %v1403
      %v1405 = vadd.f32 %v1401, %v1404
      %vm1406 = vweird.f32 %v1357
      %vm1407 = vweird.f32 %v1401
      %vm1408 = vmor %vm1406, %vm1407
      %v1409 = vsel %vm1408, %v1401, %v1405
      %v1410 = vand.u32 2147483647, %v1357
      %vm1411 = vcmp.eq.f32.partialorder %v1410, 8.507059e+37
      %v1412 = vand.u32 %v1357, 2147483648
      %v1413 = vor.u32 1.1754944e-38, %v1412
      %v1414 = vsel %vm1411, %v1413, %v1409
      %v1415 = vmul.f32 %v1341, %v1414
      %v1416 = vrcp.pop %v1358
      %v1417 = vmul.f32 %v1358, %v1416
      %v1418 = vsub.f32 1.0, %v1417
      %v1419 = vmul.f32 %v1416, %v1418
      %v1420 = vadd.f32 %v1416, %v1419
      %vm1421 = vweird.f32 %v1358
      %vm1422 = vweird.f32 %v1416
      %vm1423 = vmor %vm1421, %vm1422
      %v1424 = vsel %vm1423, %v1416, %v1420
      %v1425 = vand.u32 2147483647, %v1358
      %vm1426 = vcmp.eq.f32.partialorder %v1425, 8.507059e+37
      %v1427 = vand.u32 %v1358, 2147483648
      %v1428 = vor.u32 1.1754944e-38, %v1427
      %v1429 = vsel %vm1426, %v1428, %v1424
      %v1430 = vmul.f32 %v1342, %v1429
      %v1431 = vrcp.pop %v1359
      %v1432 = vmul.f32 %v1359, %v1431
      %v1433 = vsub.f32 1.0, %v1432
      %v1434 = vmul.f32 %v1431, %v1433
      %v1435 = vadd.f32 %v1431, %v1434
      %vm1436 = vweird.f32 %v1359
      %vm1437 = vweird.f32 %v1431
      %vm1438 = vmor %vm1436, %vm1437
      %v1439 = vsel %vm1438, %v1431, %v1435
      %v1440 = vand.u32 2147483647, %v1359
      %vm1441 = vcmp.eq.f32.partialorder %v1440, 8.507059e+37
      %v1442 = vand.u32 %v1359, 2147483648
      %v1443 = vor.u32 1.1754944e-38, %v1442
      %v1444 = vsel %vm1441, %v1443, %v1439
      %v1445 = vmul.f32 %v1343, %v1444
      %v1446 = vrcp.pop %v1360
      %v1447 = vmul.f32 %v1360, %v1446
      %v1448 = vsub.f32 1.0, %v1447
      %v1449 = vmul.f32 %v1446, %v1448
      %v1450 = vadd.f32 %v1446, %v1449
      %vm1451 = vweird.f32 %v1360
      %vm1452 = vweird.f32 %v1446
      %vm1453 = vmor %vm1451, %vm1452
      %v1454 = vsel %vm1453, %v1446, %v1450
      %v1455 = vand.u32 2147483647, %v1360
      %vm1456 = vcmp.eq.f32.partialorder %v1455, 8.507059e+37
      %v1457 = vand.u32 %v1360, 2147483648
      %v1458 = vor.u32 1.1754944e-38, %v1457
      %v1459 = vsel %vm1456, %v1458, %v1454
      %v1460 = vmul.f32 %v1344, %v1459
      %v1461 = vrcp.pop %v1361
      %v1462 = vmul.f32 %v1361, %v1461
      %v1463 = vsub.f32 1.0, %v1462
      %v1464 = vmul.f32 %v1461, %v1463
      %v1465 = vadd.f32 %v1461, %v1464
      %vm1466 = vweird.f32 %v1361
      %vm1467 = vweird.f32 %v1461
      %vm1468 = vmor %vm1466, %vm1467
      %v1469 = vsel %vm1468, %v1461, %v1465
      %v1470 = vand.u32 2147483647, %v1361
      %vm1471 = vcmp.eq.f32.partialorder %v1470, 8.507059e+37
      %v1472 = vand.u32 %v1361, 2147483648
      %v1473 = vor.u32 1.1754944e-38, %v1472
      %v1474 = vsel %vm1471, %v1473, %v1469
      %v1475 = vmul.f32 %v1345, %v1474
      %v1476 = vrcp.pop %v1362
      %v1477 = vmul.f32 %v1362, %v1476
      %v1478 = vsub.f32 1.0, %v1477
      %v1479 = vmul.f32 %v1476, %v1478
      %v1480 = vadd.f32 %v1476, %v1479
      %vm1481 = vweird.f32 %v1362
      %vm1482 = vweird.f32 %v1476
      %vm1483 = vmor %vm1481, %vm1482
      %v1484 = vsel %vm1483, %v1476, %v1480
      %v1485 = vand.u32 2147483647, %v1362
      %vm1486 = vcmp.eq.f32.partialorder %v1485, 8.507059e+37
      %v1487 = vand.u32 %v1362, 2147483648
      %v1488 = vor.u32 1.1754944e-38, %v1487
      %v1489 = vsel %vm1486, %v1488, %v1484
      %v1490 = vmul.f32 %v1346, %v1489
      %v1491 = vrcp.pop %v1363
      %v1492 = vmul.f32 %v1363, %v1491
      %v1493 = vsub.f32 1.0, %v1492
      %v1494 = vmul.f32 %v1491, %v1493
      %v1495 = vadd.f32 %v1491, %v1494
      %vm1496 = vweird.f32 %v1363
      %vm1497 = vweird.f32 %v1491
      %vm1498 = vmor %vm1496, %vm1497
      %v1499 = vsel %vm1498, %v1491, %v1495
      %v1500 = vand.u32 2147483647, %v1363
      %vm1501 = vcmp.eq.f32.partialorder %v1500, 8.507059e+37
      %v1502 = vand.u32 %v1363, 2147483648
      %v1503 = vor.u32 1.1754944e-38, %v1502
      %v1504 = vsel %vm1501, %v1503, %v1499
      %v1505 = vmul.f32 %v1347, %v1504
      %v1506 = vrcp.pop %v1364
      %v1507 = vmul.f32 %v1364, %v1506
      %v1508 = vsub.f32 1.0, %v1507
      %v1509 = vmul.f32 %v1506, %v1508
      %v1510 = vadd.f32 %v1506, %v1509
      %vm1511 = vweird.f32 %v1364
      %vm1512 = vweird.f32 %v1506
      %vm1513 = vmor %vm1511, %vm1512
      %v1514 = vsel %vm1513, %v1506, %v1510
      %v1515 = vand.u32 2147483647, %v1364
      %vm1516 = vcmp.eq.f32.partialorder %v1515, 8.507059e+37
      %v1517 = vand.u32 %v1364, 2147483648
      %v1518 = vor.u32 1.1754944e-38, %v1517
      %v1519 = vsel %vm1516, %v1518, %v1514
      %v1520 = vmul.f32 %v1348, %v1519
      %v1521 = vrcp.pop %v1365
      %v1522 = vmul.f32 %v1365, %v1521
      %v1523 = vsub.f32 1.0, %v1522
      %v1524 = vmul.f32 %v1521, %v1523
      %v1525 = vadd.f32 %v1521, %v1524
      %vm1526 = vweird.f32 %v1365
      %vm1527 = vweird.f32 %v1521
      %vm1528 = vmor %vm1526, %vm1527
      %v1529 = vsel %vm1528, %v1521, %v1525
      %v1530 = vand.u32 2147483647, %v1365
      %vm1531 = vcmp.eq.f32.partialorder %v1530, 8.507059e+37
      %v1532 = vand.u32 %v1365, 2147483648
      %v1533 = vor.u32 1.1754944e-38, %v1532
      %v1534 = vsel %vm1531, %v1533, %v1529
      %v1535 = vmul.f32 %v1349, %v1534
      %v1536 = vrcp.pop %v1366
      %v1537 = vmul.f32 %v1366, %v1536
      %v1538 = vsub.f32 1.0, %v1537
      %v1539 = vmul.f32 %v1536, %v1538
      %v1540 = vadd.f32 %v1536, %v1539
      %vm1541 = vweird.f32 %v1366
      %vm1542 = vweird.f32 %v1536
      %vm1543 = vmor %vm1541, %vm1542
      %v1544 = vsel %vm1543, %v1536, %v1540
      %v1545 = vand.u32 2147483647, %v1366
      %vm1546 = vcmp.eq.f32.partialorder %v1545, 8.507059e+37
      %v1547 = vand.u32 %v1366, 2147483648
      %v1548 = vor.u32 1.1754944e-38, %v1547
      %v1549 = vsel %vm1546, %v1548, %v1544
      %v1550 = vmul.f32 %v1350, %v1549
      %v1551 = vrcp.pop %v1367
      %v1552 = vmul.f32 %v1367, %v1551
      %v1553 = vsub.f32 1.0, %v1552
      %v1554 = vmul.f32 %v1551, %v1553
      %v1555 = vadd.f32 %v1551, %v1554
      %vm1556 = vweird.f32 %v1367
      %vm1557 = vweird.f32 %v1551
      %vm1558 = vmor %vm1556, %vm1557
      %v1559 = vsel %vm1558, %v1551, %v1555
      %v1560 = vand.u32 2147483647, %v1367
      %vm1561 = vcmp.eq.f32.partialorder %v1560, 8.507059e+37
      %v1562 = vand.u32 %v1367, 2147483648
      %v1563 = vor.u32 1.1754944e-38, %v1562
      %v1564 = vsel %vm1561, %v1563, %v1559
      %v1565 = vmul.f32 %v1351, %v1564
      %v1566 = vrcp.pop %v1368
      %v1567 = vmul.f32 %v1368, %v1566
      %v1568 = vsub.f32 1.0, %v1567
      %v1569 = vmul.f32 %v1566, %v1568
      %v1570 = vadd.f32 %v1566, %v1569
      %vm1571 = vweird.f32 %v1368
      %vm1572 = vweird.f32 %v1566
      %vm1573 = vmor %vm1571, %vm1572
      %v1574 = vsel %vm1573, %v1566, %v1570
      %v1575 = vand.u32 2147483647, %v1368
      %vm1576 = vcmp.eq.f32.partialorder %v1575, 8.507059e+37
      %v1577 = vand.u32 %v1368, 2147483648
      %v1578 = vor.u32 1.1754944e-38, %v1577
      %v1579 = vsel %vm1576, %v1578, %v1574
      %v1580 = vmul.f32 %v1352, %v1579
      %v1581 = vrcp.pop %v1369
      %v1582 = vmul.f32 %v1369, %v1581
      %v1583 = vsub.f32 1.0, %v1582
      %v1584 = vmul.f32 %v1581, %v1583
      %v1585 = vadd.f32 %v1581, %v1584
      %vm1586 = vweird.f32 %v1369
      %vm1587 = vweird.f32 %v1581
      %vm1588 = vmor %vm1586, %vm1587
      %v1589 = vsel %vm1588, %v1581, %v1585
      %v1590 = vand.u32 2147483647, %v1369
      %vm1591 = vcmp.eq.f32.partialorder %v1590, 8.507059e+37
      %v1592 = vand.u32 %v1369, 2147483648
      %v1593 = vor.u32 1.1754944e-38, %v1592
      %v1594 = vsel %vm1591, %v1593, %v1589
      %v1595 = vmul.f32 %v1353, %v1594
      %v1596 = vrcp.pop %v1370
      %v1597 = vmul.f32 %v1370, %v1596
      %v1598 = vsub.f32 1.0, %v1597
      %v1599 = vmul.f32 %v1596, %v1598
      %v1600 = vadd.f32 %v1596, %v1599
      %vm1601 = vweird.f32 %v1370
      %vm1602 = vweird.f32 %v1596
      %vm1603 = vmor %vm1601, %vm1602
      %v1604 = vsel %vm1603, %v1596, %v1600
      %v1605 = vand.u32 2147483647, %v1370
      %vm1606 = vcmp.eq.f32.partialorder %v1605, 8.507059e+37
      %v1607 = vand.u32 %v1370, 2147483648
      %v1608 = vor.u32 1.1754944e-38, %v1607
      %v1609 = vsel %vm1606, %v1608, %v1604
      %v1610 = vmul.f32 %v1354, %v1609
      %v1611 = vmul.f32 %v1385, %v1385
      %v1612 = vmul.f32 %v1400, %v1400
      %v1613 = vmul.f32 %v1415, %v1415
      %v1614 = vmul.f32 %v1430, %v1430
      %v1615 = vmul.f32 %v1445, %v1445
      %v1616 = vmul.f32 %v1460, %v1460
      %v1617 = vmul.f32 %v1475, %v1475
      %v1618 = vmul.f32 %v1490, %v1490
      %v1619 = vmul.f32 %v1505, %v1505
      %v1620 = vmul.f32 %v1520, %v1520
      %v1621 = vmul.f32 %v1535, %v1535
      %v1622 = vmul.f32 %v1550, %v1550
      %v1623 = vmul.f32 %v1565, %v1565
      %v1624 = vmul.f32 %v1580, %v1580
      %v1625 = vmul.f32 %v1595, %v1595
      %v1626 = vmul.f32 %v1610, %v1610
      %v1627 = vmul.f32 %v1611, -0.0117212
      %v1628 = vmul.f32 %v1612, -0.0117212
      %v1629 = vmul.f32 %v1613, -0.0117212
      %v1630 = vmul.f32 %v1614, -0.0117212
      %v1631 = vmul.f32 %v1615, -0.0117212
      %v1632 = vmul.f32 %v1616, -0.0117212
      %v1633 = vmul.f32 %v1617, -0.0117212
      %v1634 = vmul.f32 %v1618, -0.0117212
      %v1635 = vmul.f32 %v1619, -0.0117212
      %v1636 = vmul.f32 %v1620, -0.0117212
      %v1637 = vmul.f32 %v1621, -0.0117212
      %v1638 = vmul.f32 %v1622, -0.0117212
      %v1639 = vmul.f32 %v1623, -0.0117212
      %v1640 = vmul.f32 %v1624, -0.0117212
      %v1641 = vmul.f32 %v1625, -0.0117212
      %v1642 = vmul.f32 %v1626, -0.0117212
      %v1643 = vadd.f32 %v1627, 0.05265332
      %v1644 = vadd.f32 %v1628, 0.05265332
      %v1645 = vadd.f32 %v1629, 0.05265332
      %v1646 = vadd.f32 %v1630, 0.05265332
      %v1647 = vadd.f32 %v1631, 0.05265332
      %v1648 = vadd.f32 %v1632, 0.05265332
      %v1649 = vadd.f32 %v1633, 0.05265332
      %v1650 = vadd.f32 %v1634, 0.05265332
      %v1651 = vadd.f32 %v1635, 0.05265332
      %v1652 = vadd.f32 %v1636, 0.05265332
      %v1653 = vadd.f32 %v1637, 0.05265332
      %v1654 = vadd.f32 %v1638, 0.05265332
      %v1655 = vadd.f32 %v1639, 0.05265332
      %v1656 = vadd.f32 %v1640, 0.05265332
      %v1657 = vadd.f32 %v1641, 0.05265332
      %v1658 = vadd.f32 %v1642, 0.05265332
      %v1659 = vmul.f32 %v1643, %v1611
      %v1660 = vmul.f32 %v1644, %v1612
      %v1661 = vmul.f32 %v1645, %v1613
      %v1662 = vmul.f32 %v1646, %v1614
      %v1663 = vmul.f32 %v1647, %v1615
      %v1664 = vmul.f32 %v1648, %v1616
      %v1665 = vmul.f32 %v1649, %v1617
      %v1666 = vmul.f32 %v1650, %v1618
      %v1667 = vmul.f32 %v1651, %v1619
      %v1668 = vmul.f32 %v1652, %v1620
      %v1669 = vmul.f32 %v1653, %v1621
      %v1670 = vmul.f32 %v1654, %v1622
      %v1671 = vmul.f32 %v1655, %v1623
      %v1672 = vmul.f32 %v1656, %v1624
      %v1673 = vmul.f32 %v1657, %v1625
      %v1674 = vmul.f32 %v1658, %v1626
      %v1675 = vsub.f32 %v1659, 0.11643287
      %v1676 = vsub.f32 %v1660, 0.11643287
      %v1677 = vsub.f32 %v1661, 0.11643287
      %v1678 = vsub.f32 %v1662, 0.11643287
      %v1679 = vsub.f32 %v1663, 0.11643287
      %v1680 = vsub.f32 %v1664, 0.11643287
      %v1681 = vsub.f32 %v1665, 0.11643287
      %v1682 = vsub.f32 %v1666, 0.11643287
      %v1683 = vsub.f32 %v1667, 0.11643287
      %v1684 = vsub.f32 %v1668, 0.11643287
      %v1685 = vsub.f32 %v1669, 0.11643287
      %v1686 = vsub.f32 %v1670, 0.11643287
      %v1687 = vsub.f32 %v1671, 0.11643287
      %v1688 = vsub.f32 %v1672, 0.11643287
      %v1689 = vsub.f32 %v1673, 0.11643287
      %v1690 = vsub.f32 %v1674, 0.11643287
      %v1691 = vmul.f32 %v1675, %v1611
      %v1692 = vmul.f32 %v1676, %v1612
      %v1693 = vmul.f32 %v1677, %v1613
      %v1694 = vmul.f32 %v1678, %v1614
      %v1695 = vmul.f32 %v1679, %v1615
      %v1696 = vmul.f32 %v1680, %v1616
      %v1697 = vmul.f32 %v1681, %v1617
      %v1698 = vmul.f32 %v1682, %v1618
      %v1699 = vmul.f32 %v1683, %v1619
      %v1700 = vmul.f32 %v1684, %v1620
      %v1701 = vmul.f32 %v1685, %v1621
      %v1702 = vmul.f32 %v1686, %v1622
      %v1703 = vmul.f32 %v1687, %v1623
      %v1704 = vmul.f32 %v1688, %v1624
      %v1705 = vmul.f32 %v1689, %v1625
      %v1706 = vmul.f32 %v1690, %v1626
      %v1707 = vadd.f32 %v1691, 0.19354346
      %v1708 = vadd.f32 %v1692, 0.19354346
      %v1709 = vadd.f32 %v1693, 0.19354346
      %v1710 = vadd.f32 %v1694, 0.19354346
      %v1711 = vadd.f32 %v1695, 0.19354346
      %v1712 = vadd.f32 %v1696, 0.19354346
      %v1713 = vadd.f32 %v1697, 0.19354346
      %v1714 = vadd.f32 %v1698, 0.19354346
      %v1715 = vadd.f32 %v1699, 0.19354346
      %v1716 = vadd.f32 %v1700, 0.19354346
      %v1717 = vadd.f32 %v1701, 0.19354346
      %v1718 = vadd.f32 %v1702, 0.19354346
      %v1719 = vadd.f32 %v1703, 0.19354346
      %v1720 = vadd.f32 %v1704, 0.19354346
      %v1721 = vadd.f32 %v1705, 0.19354346
      %v1722 = vadd.f32 %v1706, 0.19354346
      %v1723 = vmul.f32 %v1707, %v1611
      %v1724 = vmul.f32 %v1708, %v1612
      %v1725 = vmul.f32 %v1709, %v1613
      %v1726 = vmul.f32 %v1710, %v1614
      %v1727 = vmul.f32 %v1711, %v1615
      %v1728 = vmul.f32 %v1712, %v1616
      %v1729 = vmul.f32 %v1713, %v1617
      %v1730 = vmul.f32 %v1714, %v1618
      %v1731 = vmul.f32 %v1715, %v1619
      %v1732 = vmul.f32 %v1716, %v1620
      %v1733 = vmul.f32 %v1717, %v1621
      %v1734 = vmul.f32 %v1718, %v1622
      %v1735 = vmul.f32 %v1719, %v1623
      %v1736 = vmul.f32 %v1720, %v1624
      %v1737 = vmul.f32 %v1721, %v1625
      %v1738 = vmul.f32 %v1722, %v1626
      %v1739 = vsub.f32 %v1723, 0.33262348
      %v1740 = vsub.f32 %v1724, 0.33262348
      %v1741 = vsub.f32 %v1725, 0.33262348
      %v1742 = vsub.f32 %v1726, 0.33262348
      %v1743 = vsub.f32 %v1727, 0.33262348
      %v1744 = vsub.f32 %v1728, 0.33262348
      %v1745 = vsub.f32 %v1729, 0.33262348
      %v1746 = vsub.f32 %v1730, 0.33262348
      %v1747 = vsub.f32 %v1731, 0.33262348
      %v1748 = vsub.f32 %v1732, 0.33262348
      %v1749 = vsub.f32 %v1733, 0.33262348
      %v1750 = vsub.f32 %v1734, 0.33262348
      %v1751 = vsub.f32 %v1735, 0.33262348
      %v1752 = vsub.f32 %v1736, 0.33262348
      %v1753 = vsub.f32 %v1737, 0.33262348
      %v1754 = vsub.f32 %v1738, 0.33262348
      %v1755 = vmul.f32 %v1739, %v1611
      %v1756 = vmul.f32 %v1740, %v1612
      %v1757 = vmul.f32 %v1741, %v1613
      %v1758 = vmul.f32 %v1742, %v1614
      %v1759 = vmul.f32 %v1743, %v1615
      %v1760 = vmul.f32 %v1744, %v1616
      %v1761 = vmul.f32 %v1745, %v1617
      %v1762 = vmul.f32 %v1746, %v1618
      %v1763 = vmul.f32 %v1747, %v1619
      %v1764 = vmul.f32 %v1748, %v1620
      %v1765 = vmul.f32 %v1749, %v1621
      %v1766 = vmul.f32 %v1750, %v1622
      %v1767 = vmul.f32 %v1751, %v1623
      %v1768 = vmul.f32 %v1752, %v1624
      %v1769 = vmul.f32 %v1753, %v1625
      %v1770 = vmul.f32 %v1754, %v1626
      %v1771 = vadd.f32 %v1755, 0.99997723
      %v1772 = vadd.f32 %v1756, 0.99997723
      %v1773 = vadd.f32 %v1757, 0.99997723
      %v1774 = vadd.f32 %v1758, 0.99997723
      %v1775 = vadd.f32 %v1759, 0.99997723
      %v1776 = vadd.f32 %v1760, 0.99997723
      %v1777 = vadd.f32 %v1761, 0.99997723
      %v1778 = vadd.f32 %v1762, 0.99997723
      %v1779 = vadd.f32 %v1763, 0.99997723
      %v1780 = vadd.f32 %v1764, 0.99997723
      %v1781 = vadd.f32 %v1765, 0.99997723
      %v1782 = vadd.f32 %v1766, 0.99997723
      %v1783 = vadd.f32 %v1767, 0.99997723
      %v1784 = vadd.f32 %v1768, 0.99997723
      %v1785 = vadd.f32 %v1769, 0.99997723
      %v1786 = vadd.f32 %v1770, 0.99997723
      %v1787 = vmul.f32 %v1771, %v1385
      %v1788 = vmul.f32 %v1772, %v1400
      %v1789 = vmul.f32 %v1773, %v1415
      %v1790 = vmul.f32 %v1774, %v1430
      %v1791 = vmul.f32 %v1775, %v1445
      %v1792 = vmul.f32 %v1776, %v1460
      %v1793 = vmul.f32 %v1777, %v1475
      %v1794 = vmul.f32 %v1778, %v1490
      %v1795 = vmul.f32 %v1779, %v1505
      %v1796 = vmul.f32 %v1780, %v1520
      %v1797 = vmul.f32 %v1781, %v1535
      %v1798 = vmul.f32 %v1782, %v1550
      %v1799 = vmul.f32 %v1783, %v1565
      %v1800 = vmul.f32 %v1784, %v1580
      %v1801 = vmul.f32 %v1785, %v1595
      %v1802 = vmul.f32 %v1786, %v1610
      %vm1803 = vcmp.gt.f32.partialorder %v1307, %v1291
      %vm1804 = vcmp.gt.f32.partialorder %v1308, %v1292
      %vm1805 = vcmp.gt.f32.partialorder %v1309, %v1293
      %vm1806 = vcmp.gt.f32.partialorder %v1310, %v1294
      %vm1807 = vcmp.gt.f32.partialorder %v1311, %v1295
      %vm1808 = vcmp.gt.f32.partialorder %v1312, %v1296
      %vm1809 = vcmp.gt.f32.partialorder %v1313, %v1297
      %vm1810 = vcmp.gt.f32.partialorder %v1314, %v1298
      %vm1811 = vcmp.gt.f32.partialorder %v1315, %v1299
      %vm1812 = vcmp.gt.f32.partialorder %v1316, %v1300
      %vm1813 = vcmp.gt.f32.partialorder %v1317, %v1301
      %vm1814 = vcmp.gt.f32.partialorder %v1318, %v1302
      %vm1815 = vcmp.gt.f32.partialorder %v1319, %v1303
      %vm1816 = vcmp.gt.f32.partialorder %v1320, %v1304
      %vm1817 = vcmp.gt.f32.partialorder %v1321, %v1305
      %vm1818 = vcmp.gt.f32.partialorder %v1322, %v1306
      %v1819 = vsub.f32 1.5707964, %v1787
      %v1820 = vsub.f32 1.5707964, %v1788
      %v1821 = vsub.f32 1.5707964, %v1789
      %v1822 = vsub.f32 1.5707964, %v1790
      %v1823 = vsub.f32 1.5707964, %v1791
      %v1824 = vsub.f32 1.5707964, %v1792
      %v1825 = vsub.f32 1.5707964, %v1793
      %v1826 = vsub.f32 1.5707964, %v1794
      %v1827 = vsub.f32 1.5707964, %v1795
      %v1828 = vsub.f32 1.5707964, %v1796
      %v1829 = vsub.f32 1.5707964, %v1797
      %v1830 = vsub.f32 1.5707964, %v1798
      %v1831 = vsub.f32 1.5707964, %v1799
      %v1832 = vsub.f32 1.5707964, %v1800
      %v1833 = vsub.f32 1.5707964, %v1801
      %v1834 = vsub.f32 1.5707964, %v1802
      %v1835 = vsel %vm1803, %v1819, %v1787
      %v1836 = vsel %vm1804, %v1820, %v1788
      %v1837 = vsel %vm1805, %v1821, %v1789
      %v1838 = vsel %vm1806, %v1822, %v1790
      %v1839 = vsel %vm1807, %v1823, %v1791
      %v1840 = vsel %vm1808, %v1824, %v1792
      %v1841 = vsel %vm1809, %v1825, %v1793
      %v1842 = vsel %vm1810, %v1826, %v1794
      %v1843 = vsel %vm1811, %v1827, %v1795
      %v1844 = vsel %vm1812, %v1828, %v1796
      %v1845 = vsel %vm1813, %v1829, %v1797
      %v1846 = vsel %vm1814, %v1830, %v1798
      %v1847 = vsel %vm1815, %v1831, %v1799
      %v1848 = vsel %vm1816, %v1832, %v1800
      %v1849 = vsel %vm1817, %v1833, %v1801
      %v1850 = vsel %vm1818, %v1834, %v1802
      %vm1851 = vcmp.lt.f32.partialorder %v945, 0.0
      %vm1852 = vcmp.lt.f32.partialorder %v974, 0.0
      %vm1853 = vcmp.lt.f32.partialorder %v1003, 0.0
      %vm1854 = vcmp.lt.f32.partialorder %v1032, 0.0
      %vm1855 = vcmp.lt.f32.partialorder %v947, 0.0
      %vm1856 = vcmp.lt.f32.partialorder %v976, 0.0
      %vm1857 = vcmp.lt.f32.partialorder %v1005, 0.0
      %vm1858 = vcmp.lt.f32.partialorder %v1034, 0.0
      %vm1859 = vcmp.lt.f32.partialorder %v950, 0.0
      %vm1860 = vcmp.lt.f32.partialorder %v979, 0.0
      %vm1861 = vcmp.lt.f32.partialorder %v1008, 0.0
      %vm1862 = vcmp.lt.f32.partialorder %v1037, 0.0
      %vm1863 = vcmp.lt.f32.partialorder %v952, 0.0
      %vm1864 = vcmp.lt.f32.partialorder %v981, 0.0
      %vm1865 = vcmp.lt.f32.partialorder %v1010, 0.0
      %vm1866 = vcmp.lt.f32.partialorder %v1039, 0.0
      %v1867 = vsub.f32 3.1415927, %v1835
      %v1868 = vsub.f32 3.1415927, %v1836
      %v1869 = vsub.f32 3.1415927, %v1837
      %v1870 = vsub.f32 3.1415927, %v1838
      %v1871 = vsub.f32 3.1415927, %v1839
      %v1872 = vsub.f32 3.1415927, %v1840
      %v1873 = vsub.f32 3.1415927, %v1841
      %v1874 = vsub.f32 3.1415927, %v1842
      %v1875 = vsub.f32 3.1415927, %v1843
      %v1876 = vsub.f32 3.1415927, %v1844
      %v1877 = vsub.f32 3.1415927, %v1845
      %v1878 = vsub.f32 3.1415927, %v1846
      %v1879 = vsub.f32 3.1415927, %v1847
      %v1880 = vsub.f32 3.1415927, %v1848
      %v1881 = vsub.f32 3.1415927, %v1849
      %v1882 = vsub.f32 3.1415927, %v1850
      %v1883 = vsel %vm1851, %v1867, %v1835
      %v1884 = vsel %vm1852, %v1868, %v1836
      %v1885 = vsel %vm1853, %v1869, %v1837
      %v1886 = vsel %vm1854, %v1870, %v1838
      %v1887 = vsel %vm1855, %v1871, %v1839
      %v1888 = vsel %vm1856, %v1872, %v1840
      %v1889 = vsel %vm1857, %v1873, %v1841
      %v1890 = vsel %vm1858, %v1874, %v1842
      %v1891 = vsel %vm1859, %v1875, %v1843
      %v1892 = vsel %vm1860, %v1876, %v1844
      %v1893 = vsel %vm1861, %v1877, %v1845
      %v1894 = vsel %vm1862, %v1878, %v1846
      %v1895 = vsel %vm1863, %v1879, %v1847
      %v1896 = vsel %vm1864, %v1880, %v1848
      %v1897 = vsel %vm1865, %v1881, %v1849
      %v1898 = vsel %vm1866, %v1882, %v1850
      %vm1899 = vcmp.lt.f32.partialorder %v955, 0.0
      %vm1900 = vcmp.lt.f32.partialorder %v984, 0.0
      %vm1901 = vcmp.lt.f32.partialorder %v1013, 0.0
      %vm1902 = vcmp.lt.f32.partialorder %v1042, 0.0
      %vm1903 = vcmp.lt.f32.partialorder %v957, 0.0
      %vm1904 = vcmp.lt.f32.partialorder %v986, 0.0
      %vm1905 = vcmp.lt.f32.partialorder %v1015, 0.0
      %vm1906 = vcmp.lt.f32.partialorder %v1044, 0.0
      %vm1907 = vcmp.lt.f32.partialorder %v960, 0.0
      %vm1908 = vcmp.lt.f32.partialorder %v989, 0.0
      %vm1909 = vcmp.lt.f32.partialorder %v1018, 0.0
      %vm1910 = vcmp.lt.f32.partialorder %v1047, 0.0
      %vm1911 = vcmp.lt.f32.partialorder %v962, 0.0
      %vm1912 = vcmp.lt.f32.partialorder %v991, 0.0
      %vm1913 = vcmp.lt.f32.partialorder %v1020, 0.0
      %vm1914 = vcmp.lt.f32.partialorder %v1049, 0.0
      %v1915 = vsub.f32 0.0, %v1883
      %v1916 = vsub.f32 0.0, %v1884
      %v1917 = vsub.f32 0.0, %v1885
      %v1918 = vsub.f32 0.0, %v1886
      %v1919 = vsub.f32 0.0, %v1887
      %v1920 = vsub.f32 0.0, %v1888
      %v1921 = vsub.f32 0.0, %v1889
      %v1922 = vsub.f32 0.0, %v1890
      %v1923 = vsub.f32 0.0, %v1891
      %v1924 = vsub.f32 0.0, %v1892
      %v1925 = vsub.f32 0.0, %v1893
      %v1926 = vsub.f32 0.0, %v1894
      %v1927 = vsub.f32 0.0, %v1895
      %v1928 = vsub.f32 0.0, %v1896
      %v1929 = vsub.f32 0.0, %v1897
      %v1930 = vsub.f32 0.0, %v1898
      %v1931 = vsel %vm1899, %v1915, %v1883
      %v1932 = vsel %vm1900, %v1916, %v1884
      %v1933 = vsel %vm1901, %v1917, %v1885
      %v1934 = vsel %vm1902, %v1918, %v1886
      %v1935 = vsel %vm1903, %v1919, %v1887
      %v1936 = vsel %vm1904, %v1920, %v1888
      %v1937 = vsel %vm1905, %v1921, %v1889
      %v1938 = vsel %vm1906, %v1922, %v1890
      %v1939 = vsel %vm1907, %v1923, %v1891
      %v1940 = vsel %vm1908, %v1924, %v1892
      %v1941 = vsel %vm1909, %v1925, %v1893
      %v1942 = vsel %vm1910, %v1926, %v1894
      %v1943 = vsel %vm1911, %v1927, %v1895
      %v1944 = vsel %vm1912, %v1928, %v1896
      %v1945 = vsel %vm1913, %v1929, %v1897
      %v1946 = vsel %vm1914, %v1930, %v1898
      %v1947 = vld [vmem:[%s6] sm:$0xf]
      %v1948 = vld [vmem:[%s6 + $0x4] sm:$0xf]
      %v1949 = vpack.c.bf16 %v1158, %v1110
      %v1950 = vpack.c.bf16 %v1170, %v1122
      %v1951 = vpack.c.bf16 %v1182, %v1134
      %v1952 = vpack.c.bf16 %v1194, %v1146
      %v1953 = vpack.c.bf16 %v1935, %v1931
      %v1954 = vpack.c.bf16 %v1936, %v1932
      %v1955 = vpack.c.bf16 %v1937, %v1933
      %v1956 = vpack.c.bf16 %v1938, %v1934
      %v1957 = vpack.c.bf16 %v1254, %v1206
      %v1958 = vpack.c.bf16 %v1266, %v1218
      %v1959 = vpack.c.bf16 %v1278, %v1230
      %v1960 = vpack.c.bf16 %v1290, %v1242
      %v1961 = vpack.c.bf16 %v1943, %v1939
      %v1962 = vpack.c.bf16 %v1944, %v1940
      %v1963 = vpack.c.bf16 %v1945, %v1941
      %v1964 = vpack.c.bf16 %v1946, %v1942
      %v1967 = vunpack.c.l.b16 %v1947
      %v1968 = vunpack.c.l.b16 %v1948
      %v1969 = vpack.c.b16 %v1968, %v1967
      %vm1970 = vcmask 261120
      %v1972 = vsel %vm1970, %v1969, 0
      %1974 = vmatpush.bf16.msra.mxu0 0
      %1975 = vmatpush.bf16.msra.mxu0 0
      %1976 = vmatpush.bf16.msra.mxu0 0
      %1977 = vmatpush.bf16.msra.mxu0 0
      %1978 = vmatpush.bf16.msra.mxu0 0
      %1979 = vmatpush.bf16.msra.mxu0 0
      %1980 = vmatpush.bf16.msra.mxu0 %v1957
      %1981 = vmatpush.bf16.msra.mxu0 %v1949
      %1982 = vmatmul.bf16.gmra.mxu0 %v1972
      %v1983 = vpop.f32.mrf.mxu0
      %v1984 = vadd.f32 0.0, %v1983
      %v1985 = vpop.f32.mrf.mxu0
      %v1986 = vadd.f32 0.0, %v1985
      %1987 = vdwg.mxu0
      %1988 = vmatpush.bf16.msra.mxu0 0
      %1989 = vmatpush.bf16.msra.mxu0 0
      %1990 = vmatpush.bf16.msra.mxu0 0
      %1991 = vmatpush.bf16.msra.mxu0 0
      %1992 = vmatpush.bf16.msra.mxu0 0
      %1993 = vmatpush.bf16.msra.mxu0 0
      %1994 = vmatpush.bf16.msra.mxu0 %v1958
      %1995 = vmatpush.bf16.msra.mxu0 %v1950
      %1996 = vmatmul.bf16.gmra.mxu0 %v1972
      %v1997 = vpop.f32.mrf.mxu0
      %v1998 = vadd.f32 0.0, %v1997
      %v1999 = vpop.f32.mrf.mxu0
      %v2000 = vadd.f32 0.0, %v1999
      %2001 = vdwg.mxu0
      %2002 = vmatpush.bf16.msra.mxu0 0
      %2003 = vmatpush.bf16.msra.mxu0 0
      %2004 = vmatpush.bf16.msra.mxu0 0
      %2005 = vmatpush.bf16.msra.mxu0 0
      %2006 = vmatpush.bf16.msra.mxu0 0
      %2007 = vmatpush.bf16.msra.mxu0 0
      %2008 = vmatpush.bf16.msra.mxu0 %v1959
      %2009 = vmatpush.bf16.msra.mxu0 %v1951
      %2010 = vmatmul.bf16.gmra.mxu0 %v1972
      %v2011 = vpop.f32.mrf.mxu0
      %v2012 = vadd.f32 0.0, %v2011
      %v2013 = vpop.f32.mrf.mxu0
      %v2014 = vadd.f32 0.0, %v2013
      %2015 = vdwg.mxu0
      %2016 = vmatpush.bf16.msra.mxu0 0
      %2017 = vmatpush.bf16.msra.mxu0 0
      %2018 = vmatpush.bf16.msra.mxu0 0
      %2019 = vmatpush.bf16.msra.mxu0 0
      %2020 = vmatpush.bf16.msra.mxu0 0
      %2021 = vmatpush.bf16.msra.mxu0 0
      %2022 = vmatpush.bf16.msra.mxu0 %v1960
      %2023 = vmatpush.bf16.msra.mxu0 %v1952
      %2024 = vmatmul.bf16.gmra.mxu0 %v1972
      %v2025 = vpop.f32.mrf.mxu0
      %v2026 = vadd.f32 0.0, %v2025
      %v2027 = vpop.f32.mrf.mxu0
      %v2028 = vadd.f32 0.0, %v2027
      %2029 = vdwg.mxu0
      %2030 = vmatpush.bf16.msra.mxu0 0
      %2031 = vmatpush.bf16.msra.mxu0 0
      %2032 = vmatpush.bf16.msra.mxu0 0
      %2033 = vmatpush.bf16.msra.mxu0 0
      %2034 = vmatpush.bf16.msra.mxu0 0
      %2035 = vmatpush.bf16.msra.mxu0 0
      %2036 = vmatpush.bf16.msra.mxu0 %v1961
      %2037 = vmatpush.bf16.msra.mxu0 %v1953
      %2038 = vmatmul.bf16.gmra.mxu0 %v1972
      %v2039 = vpop.f32.mrf.mxu0
      %v2040 = vadd.f32 0.0, %v2039
      %v2041 = vpop.f32.mrf.mxu0
      %v2042 = vadd.f32 0.0, %v2041
      %2043 = vdwg.mxu0
      %2044 = vmatpush.bf16.msra.mxu0 0
      %2045 = vmatpush.bf16.msra.mxu0 0
      %2046 = vmatpush.bf16.msra.mxu0 0
      %2047 = vmatpush.bf16.msra.mxu0 0
      %2048 = vmatpush.bf16.msra.mxu0 0
      %2049 = vmatpush.bf16.msra.mxu0 0
      %2050 = vmatpush.bf16.msra.mxu0 %v1962
      %2051 = vmatpush.bf16.msra.mxu0 %v1954
      %2052 = vmatmul.bf16.gmra.mxu0 %v1972
      %v2053 = vpop.f32.mrf.mxu0
      %v2054 = vadd.f32 0.0, %v2053
      %v2055 = vpop.f32.mrf.mxu0
      %v2056 = vadd.f32 0.0, %v2055
      %2057 = vdwg.mxu0
      %2058 = vmatpush.bf16.msra.mxu0 0
      %2059 = vmatpush.bf16.msra.mxu0 0
      %2060 = vmatpush.bf16.msra.mxu0 0
      %2061 = vmatpush.bf16.msra.mxu0 0
      %2062 = vmatpush.bf16.msra.mxu0 0
      %2063 = vmatpush.bf16.msra.mxu0 0
      %2064 = vmatpush.bf16.msra.mxu0 %v1963
      %2065 = vmatpush.bf16.msra.mxu0 %v1955
      %2066 = vmatmul.bf16.gmra.mxu0 %v1972
      %v2067 = vpop.f32.mrf.mxu0
      %v2068 = vadd.f32 0.0, %v2067
      %v2069 = vpop.f32.mrf.mxu0
      %v2070 = vadd.f32 0.0, %v2069
      %2071 = vdwg.mxu0
      %2072 = vmatpush.bf16.msra.mxu0 0
      %2073 = vmatpush.bf16.msra.mxu0 0
      %2074 = vmatpush.bf16.msra.mxu0 0
      %2075 = vmatpush.bf16.msra.mxu0 0
      %2076 = vmatpush.bf16.msra.mxu0 0
      %2077 = vmatpush.bf16.msra.mxu0 0
      %2078 = vmatpush.bf16.msra.mxu0 %v1964
      %2079 = vmatpush.bf16.msra.mxu0 %v1956
      %2080 = vmatmul.bf16.gmra.mxu0 %v1972
      %v2081 = vpop.f32.mrf.mxu0
      %v2082 = vadd.f32 0.0, %v2081
      %v2083 = vpop.f32.mrf.mxu0
      %v2084 = vadd.f32 0.0, %v2083
      %2085 = vdwg.mxu0
      %v2086 = vpack.c.bf16 %v1986, %v1984
      %v2087 = vpack.c.bf16 %v2000, %v1998
      %v2088 = vpack.c.bf16 %v2014, %v2012
      %v2089 = vpack.c.bf16 %v2028, %v2026
      %v2090 = vpack.c.bf16 %v2042, %v2040
      %v2091 = vpack.c.bf16 %v2056, %v2054
      %v2092 = vpack.c.bf16 %v2070, %v2068
      %v2093 = vpack.c.bf16 %v2084, %v2082
      %v2094 = vld [vmem:[%s7] sm:$0xf]
      %v2095 = vld [vmem:[%s7 + $0x4] sm:$0xf]
      %v2096 = vld [vmem:[%s7 + $0x8] sm:$0xf]
      %v2097 = vld [vmem:[%s7 + $0xc] sm:$0xf]
      %v2098 = vld [vmem:[%s7 + $0x10] sm:$0xf]
      %v2099 = vld [vmem:[%s7 + $0x14] sm:$0xf]
      %v2100 = vld [vmem:[%s7 + $0x18] sm:$0xf]
      %v2101 = vld [vmem:[%s7 + $0x1c] sm:$0xf]
      %v2102 = vld [vmem:[%s7 + $0x20] sm:$0xf]
      %v2103 = vld [vmem:[%s7 + $0x24] sm:$0xf]
      %v2104 = vld [vmem:[%s7 + $0x28] sm:$0xf]
      %v2105 = vld [vmem:[%s7 + $0x2c] sm:$0xf]
      %v2106 = vld [vmem:[%s7 + $0x30] sm:$0xf]
      %v2107 = vld [vmem:[%s7 + $0x34] sm:$0xf]
      %v2108 = vld [vmem:[%s7 + $0x38] sm:$0xf]
      %v2109 = vld [vmem:[%s7 + $0x3c] sm:$0xf]
      %v2126 = vunpack.c.l.b16 %v2094
      %v2127 = vunpack.c.l.b16 %v2095
      %v2128 = vunpack.c.l.b16 %v2096
      %v2129 = vunpack.c.l.b16 %v2097
      %v2130 = vunpack.c.l.b16 %v2098
      %v2131 = vunpack.c.l.b16 %v2099
      %v2132 = vunpack.c.l.b16 %v2100
      %v2133 = vunpack.c.l.b16 %v2101
      %v2134 = vunpack.c.l.b16 %v2102
      %v2135 = vunpack.c.l.b16 %v2103
      %v2136 = vunpack.c.l.b16 %v2104
      %v2137 = vunpack.c.l.b16 %v2105
      %v2138 = vunpack.c.l.b16 %v2106
      %v2139 = vunpack.c.l.b16 %v2107
      %v2140 = vunpack.c.l.b16 %v2108
      %v2141 = vunpack.c.l.b16 %v2109
      %v2142 = vpack.c.b16 %v2127, %v2126
      %v2143 = vpack.c.b16 %v2129, %v2128
      %v2144 = vpack.c.b16 %v2131, %v2130
      %v2145 = vpack.c.b16 %v2133, %v2132
      %v2146 = vpack.c.b16 %v2135, %v2134
      %v2147 = vpack.c.b16 %v2137, %v2136
      %v2148 = vpack.c.b16 %v2139, %v2138
      %v2149 = vpack.c.b16 %v2141, %v2140
      %2158 = vmatpush.bf16.msra.mxu0 %v2149
      %2159 = vmatpush.bf16.msra.mxu0 %v2148
      %2160 = vmatpush.bf16.msra.mxu0 %v2147
      %2161 = vmatpush.bf16.msra.mxu0 %v2146
      %2162 = vmatpush.bf16.msra.mxu0 %v2145
      %2163 = vmatpush.bf16.msra.mxu0 %v2144
      %2164 = vmatpush.bf16.msra.mxu0 %v2143
      %2165 = vmatpush.bf16.msra.mxu0 %v2142
      %2166 = vmatmul.bf16.gmra.mxu0 %v2086
      %v2167 = vpop.f32.mrf.mxu0
      %v2168 = vadd.f32 0.0, %v2167
      %v2169 = vpop.f32.mrf.mxu0
      %v2170 = vadd.f32 0.0, %v2169
      %2171 = vmatmul.bf16.gmra.mxu0 %v2087
      %v2172 = vpop.f32.mrf.mxu0
      %v2173 = vadd.f32 0.0, %v2172
      %v2174 = vpop.f32.mrf.mxu0
      %v2175 = vadd.f32 0.0, %v2174
      %2176 = vmatmul.bf16.gmra.mxu0 %v2088
      %v2177 = vpop.f32.mrf.mxu0
      %v2178 = vadd.f32 0.0, %v2177
      %v2179 = vpop.f32.mrf.mxu0
      %v2180 = vadd.f32 0.0, %v2179
      %2181 = vmatmul.bf16.gmra.mxu0 %v2089
      %v2182 = vpop.f32.mrf.mxu0
      %v2183 = vadd.f32 0.0, %v2182
      %v2184 = vpop.f32.mrf.mxu0
      %v2185 = vadd.f32 0.0, %v2184
      %2186 = vmatmul.bf16.gmra.mxu0 %v2090
      %v2187 = vpop.f32.mrf.mxu0
      %v2188 = vadd.f32 0.0, %v2187
      %v2189 = vpop.f32.mrf.mxu0
      %v2190 = vadd.f32 0.0, %v2189
      %2191 = vmatmul.bf16.gmra.mxu0 %v2091
      %v2192 = vpop.f32.mrf.mxu0
      %v2193 = vadd.f32 0.0, %v2192
      %v2194 = vpop.f32.mrf.mxu0
      %v2195 = vadd.f32 0.0, %v2194
      %2196 = vmatmul.bf16.gmra.mxu0 %v2092
      %v2197 = vpop.f32.mrf.mxu0
      %v2198 = vadd.f32 0.0, %v2197
      %v2199 = vpop.f32.mrf.mxu0
      %v2200 = vadd.f32 0.0, %v2199
      %2201 = vmatmul.bf16.gmra.mxu0 %v2093
      %v2202 = vpop.f32.mrf.mxu0
      %v2203 = vadd.f32 0.0, %v2202
      %v2204 = vpop.f32.mrf.mxu0
      %v2205 = vadd.f32 0.0, %v2204
      %2206 = vdwg.mxu0
      %2207 = vst.msk [vmem:[%s335] sm:$0xff] %vm922, %v2168
      %2208 = vst.msk [vmem:[%s335 + $0x8] sm:$0xff] %vm922, %v2170
      %2209 = vst.msk [vmem:[%s335 + $0x10] sm:$0xff] %vm922, %v2173
      %2210 = vst.msk [vmem:[%s335 + $0x18] sm:$0xff] %vm922, %v2175
      %2211 = vst.msk [vmem:[%s335 + $0x20] sm:$0xff] %vm922, %v2178
      %2212 = vst.msk [vmem:[%s335 + $0x28] sm:$0xff] %vm922, %v2180
      %2213 = vst.msk [vmem:[%s335 + $0x30] sm:$0xff] %vm922, %v2183
      %2214 = vst.msk [vmem:[%s335 + $0x38] sm:$0xff] %vm922, %v2185
      %2223 = vrot.lane.b32.xlu0 %v2188, 64
      %v2224 = vpop.permute.xlu0 %2223
      %2225 = vrot.lane.b32.xlu0 %v2190, 64
      %v2226 = vpop.permute.xlu0 %2225
      %2227 = vrot.lane.b32.xlu0 %v2193, 64
      %v2228 = vpop.permute.xlu0 %2227
      %2229 = vrot.lane.b32.xlu0 %v2195, 64
      %v2230 = vpop.permute.xlu0 %2229
      %2231 = vrot.lane.b32.xlu0 %v2198, 64
      %v2232 = vpop.permute.xlu0 %2231
      %2233 = vrot.lane.b32.xlu0 %v2200, 64
      %v2234 = vpop.permute.xlu0 %2233
      %2235 = vrot.lane.b32.xlu0 %v2203, 64
      %v2236 = vpop.permute.xlu0 %2235
      %2237 = vrot.lane.b32.xlu0 %v2205, 64
      %v2238 = vpop.permute.xlu0 %2237
      %vm2247 = vcmask 1048064
      %2248 = vst.msk [vmem:[%s335] sm:$0xff] %vm2247, %v2224
      %2249 = vst.msk [vmem:[%s335 + $0x8] sm:$0xff] %vm2247, %v2226
      %2250 = vst.msk [vmem:[%s335 + $0x10] sm:$0xff] %vm2247, %v2228
      %2251 = vst.msk [vmem:[%s335 + $0x18] sm:$0xff] %vm2247, %v2230
      %2252 = vst.msk [vmem:[%s335 + $0x20] sm:$0xff] %vm2247, %v2232
      %2253 = vst.msk [vmem:[%s335 + $0x28] sm:$0xff] %vm2247, %v2234
      %2254 = vst.msk [vmem:[%s335 + $0x30] sm:$0xff] %vm2247, %v2236
      %2255 = vst.msk [vmem:[%s335 + $0x38] sm:$0xff] %vm2247, %v2238
      %s2256 = smul.u32 8, %s19
      %p2257 = scmp.lt.s32.totalorder %s2256, 15
      %s2258 = scalar_select %p2257, %s2256, 15
      %s2259 = smul.addr %s2258, 8
      %s2260 = scalar_lea.vmem %s8, %s2259
      // Predicated region
      $region53: #{_forward_impl.1} parent=51 // pred_check
        %p2261 = pneg %p215
      $region54: #{_forward_impl.1} parent=51 // pred_check_branch
        %2263 = sbr.rel (%p2261) target = $region56
      $region55: #{_forward_impl.1} parent=51 // pred_region
        %s2264 = smul.u32 8, %s19
      $region56: #{_forward_impl.1} parent=51 // pred_fallthru
        _
    $region52: #{_forward_impl.1} parent=5 // pred_fallthru
      _
    %p2265 = scmp.le.s32.totalorder 2, %s14
    // Predicated region
    $region57: #{_forward_impl.1} parent=5 // pred_check
      %p2266 = pneg %p2265
    $region58: #{_forward_impl.1} parent=5 // pred_check_branch
      %2268 = sbr.rel (%p2266) target = $region60
    $region59: #{_forward_impl.1} parent=5 // pred_region
      %s2269 = ssub.s32 %s14, 2
      // Predicated region
      $region61: #{_forward_impl.1} parent=59 // pred_check
        %p2270 = pneg %p221
      $region62: #{_forward_impl.1} parent=59 // pred_check_branch
        %2272 = sbr.rel (%p2270) target = $region64
      $region63: #{_forward_impl.1} parent=59 // pred_region
        %s2273 = smul.u32 8, %s20
        %p2274 = scmp.lt.s32.totalorder %s2273, 15
        %s2275 = scalar_select %p2274, %s2273, 15
        %s2276 = smul.addr %s2275, 8
        %s2277 = scalar_lea.vmem %s8, %s2276
      $region64: #{_forward_impl.1} parent=59 // pred_fallthru
        _
    $region60: #{_forward_impl.1} parent=5 // pred_fallthru
      _
  $region6: #{_forward_impl.1} parent=0 // loop_footer
    %s18 = sadd.s32 1, %s14
  $region7: #{_forward_impl.1} parent=0 // loop_footer_branch
    %13 = sbr.rel target = $region3
  $region8: #{_forward_impl.1} parent=0 // loop_exit
    _

</llo_original>
